<compile_context>
chip_gen: v7x
topology: tpu7x:2x2x1
jax: 0.10.0
libtpu: 0.0.40
codegen_flags: <defaults>
</compile_context>

<pallas_src>
import jax
import jax.numpy as jnp
from jax.experimental import pallas as pl
from jax.experimental.pallas import tpu as pltpu


def _round_up(n, m):
    return ((n + m - 1) // m) * m


# ---------------------------------------------------------------------------
# Kernel
# ---------------------------------------------------------------------------
def _gru_seq_kernel(x_ref, h0_ref, wx_ref, whrz_ref, whn_ref, bx_ref,
                    out_ref, h_scr):
    """One GRU step for one (batch-tile, time-step) grid point.

    x_ref   : (TB, Ip)   this step's input, weight dtype
    h0_ref  : (TB, Hp)   initial hidden state for this batch tile
    wx_ref  : (Ip, 3Hp)  [W_xr | W_xz | W_xn]   (VMEM-resident)
    whrz_ref: (Hp, 2Hp)  [W_hr | W_hz]          (VMEM-resident)
    whn_ref : (Hp, Hp)   W_hn                   (VMEM-resident)
    bx_ref  : (1, 3Hp)   [b_xr | b_xz | b_xn]   f32
    out_ref : (TB, Hp)   h_{t+1}
    h_scr   : (TB, Hp)   f32 hidden state carried across the time axis
    """
    Hp = out_ref.shape[-1]
    t = pl.program_id(1)

    @pl.when(t == 0)
    def _():
        h_scr[...] = h0_ref[...].astype(jnp.float32)

    h_f32 = h_scr[...]
    h = h_f32.astype(whrz_ref.dtype)

    # One fused x-side matmul: (TB, Ip) @ (Ip, 3Hp) -> [xr | xz | xn]
    xg = jnp.dot(x_ref[...], wx_ref[...],
                 preferred_element_type=jnp.float32) + bx_ref[...]
    # One fused h-side matmul for r/z: (TB, Hp) @ (Hp, 2Hp) -> [hr | hz]
    hg = jnp.dot(h, whrz_ref[...], preferred_element_type=jnp.float32)

    r = jax.nn.sigmoid(xg[:, :Hp] + hg[:, :Hp])
    z = jax.nn.sigmoid(xg[:, Hp:2 * Hp] + hg[:, Hp:])

    # Candidate gate: r applied BEFORE the hidden matmul (module semantics).
    rh = (r * h_f32).astype(whn_ref.dtype)
    g = jnp.tanh(
        xg[:, 2 * Hp:]
        + jnp.dot(rh, whn_ref[...], preferred_element_type=jnp.float32))

    h_new = z * h_f32 + (1.0 - z) * g          # blend kept in f32
    h_scr[...] = h_new
    out_ref[...] = h_new.astype(out_ref.dtype)


# ---------------------------------------------------------------------------
# Parameter prep (one-time, off the hot path)
# ---------------------------------------------------------------------------
def prepare_params(params, weight_dtype=jnp.bfloat16):
    """Transpose to (in, out), fuse gates along the output dim, pad to
    lane-dense shapes, cast weights.  Reuse across steps/sequences."""
    H, I = params["W_xr"].shape               # torch Linear layout: (out, in)
    Ip = _round_up(I, 128)
    Hp = _round_up(H, 128)

    def pad_t(w, rows, cols):
        wt = w.T                               # -> (in, out)
        return jnp.pad(wt, ((0, rows - wt.shape[0]), (0, cols - wt.shape[1])))

    wx = jnp.concatenate(
        [pad_t(params[k], Ip, Hp) for k in ("W_xr", "W_xz", "W_xn")], axis=1
    ).astype(weight_dtype)                                     # (Ip, 3Hp)
    whrz = jnp.concatenate(
        [pad_t(params[k], Hp, Hp) for k in ("W_hr", "W_hz")], axis=1
    ).astype(weight_dtype)                                     # (Hp, 2Hp)
    whn = pad_t(params["W_hn"], Hp, Hp).astype(weight_dtype)   # (Hp, Hp)
    bx = jnp.concatenate(
        [jnp.pad(params[k], (0, Hp - H)) for k in ("b_xr", "b_xz", "b_xn")]
    ).reshape(1, 3 * Hp).astype(jnp.float32)                   # (1, 3Hp)

    return {
        "wx": wx, "whrz": whrz, "whn": whn, "bx": bx,
        "input_size": I, "hidden_size": H, "Ip": Ip, "Hp": Hp,
    }


# ---------------------------------------------------------------------------
# Wrapper helpers
# ---------------------------------------------------------------------------
def _pad_to(a, shape, dtype=None):
    """Cast (optional) and zero-pad `a` up to `shape`; no-op when unchanged."""
    if dtype is not None and a.dtype != dtype:
        a = a.astype(dtype)
    pads = [(0, s - d) for s, d in zip(shape, a.shape)]
    if any(p for _, p in pads):
        a = jnp.pad(a, pads)
    return a


def _pick_batch_tile(B8, multi_step):
    """Batch tile: <=256 rows (v6e/v7x MXU width).  In the compute-bound
    in-kernel-T-loop regime, prefer >=2 tiles so the "parallel" batch axis
    can shard across the 2 TensorCores on v7x."""
    if B8 <= 8:
        return B8
    if multi_step and 16 <= B8 <= 512:
        return max(_round_up(B8 // 2, 8), 8)
    return min(B8, 256)


def _vmem_limit_bytes(TB, Ip, Hp, w_bytes, act_bytes, out_bytes):
    """Scoped-VMEM budget derived from actual block sizes (conservatively
    assumes double-buffered weights), clamped to ~85% of physical VMEM."""
    weights = (Ip * 3 * Hp + Hp * 2 * Hp + Hp * Hp) * w_bytes * 2 + 3 * Hp * 4 * 2
    acts = TB * Ip * act_bytes * 2 + TB * Hp * out_bytes * 2 * 2
    scratch = TB * Hp * 4
    temps = TB * (3 * Hp + 2 * Hp + 6 * Hp) * 4      # xg, hg, gate temporaries
    need = weights + acts + scratch + temps
    limit = int(need * 1.4) + (4 << 20)
    try:
        cap = int(0.85 * pltpu.get_tpu_info().vmem_capacity_bytes)
    except Exception:
        cap = 64 << 20                                # conservative (v7x)
    cap = min(cap, 100 << 20)
    return max(16 << 20, min(limit, cap))


def _gru_pallas_call(T, Bp, TB, Ip, Hp, out_dtype, vmem_limit,
                     single_buffer_weights):
    const = lambda b, t: (0, 0)
    if single_buffer_weights:
        # Constant index_map => double-buffering only wastes VMEM.
        w_kwargs = dict(pipeline_mode=pl.Buffered(1))
    else:
        w_kwargs = {}

    grid_spec = pltpu.PrefetchScalarGridSpec(
        num_scalar_prefetch=0,
        grid=(Bp // TB, T),                                         # (batch, time)
        in_specs=[
            pl.BlockSpec((None, TB, Ip), lambda b, t: (t, b, 0)),   # x_t tile
            pl.BlockSpec((TB, Hp), lambda b, t: (b, 0)),            # h0 tile
            pl.BlockSpec((Ip, 3 * Hp), const, **w_kwargs),          # fused Wx
            pl.BlockSpec((Hp, 2 * Hp), const, **w_kwargs),          # fused Whr|Whz
            pl.BlockSpec((Hp, Hp), const, **w_kwargs),              # Whn
            pl.BlockSpec((1, 3 * Hp), const, **w_kwargs),           # fused bias
        ],
        out_specs=pl.BlockSpec((None, TB, Hp), lambda b, t: (t, b, 0)),
        scratch_shapes=[pltpu.VMEM((TB, Hp), jnp.float32)],         # h carry
    )
    return pl.pallas_call(
        _gru_seq_kernel,
        out_shape=jax.ShapeDtypeStruct((T, Bp, Hp), out_dtype),
        grid_spec=grid_spec,
        compiler_params=pltpu.CompilerParams(
            # batch tiles -> the 2 TensorCores on v7x; time is sequential.
            dimension_semantics=("parallel", "arbitrary"),
            vmem_limit_bytes=vmem_limit,
        ),
    )


# ---------------------------------------------------------------------------
# Public entry points
# ---------------------------------------------------------------------------
def gru_sequence(xs, h0, prep):
    """Run the GRU cell over a whole sequence inside one kernel.

    xs: (T, B, input_size), h0: (B, hidden_size) -> (T, B, hidden_size).
    Weights stay VMEM-resident for all T steps (one HBM fetch per sequence
    per TensorCore).
    """
    T, B, _ = xs.shape
    H = prep["hidden_size"]
    Ip, Hp = prep["Ip"], prep["Hp"]
    wdt = prep["wx"].dtype

    B8 = _round_up(max(B, 1), 8)
    TB = _pick_batch_tile(B8, multi_step=(T > 1))
    Bp = _round_up(B8, TB)

    xs_p = _pad_to(xs, (T, Bp, Ip), dtype=wdt)       # activations in weight dtype
    h0_p = _pad_to(h0, (Bp, Hp))

    vmem_limit = _vmem_limit_bytes(
        TB, Ip, Hp, jnp.dtype(wdt).itemsize, jnp.dtype(wdt).itemsize,
        jnp.dtype(h0.dtype).itemsize)

    args = (xs_p, h0_p, prep["wx"], prep["whrz"], prep["whn"], prep["bx"])
    try:
        out = _gru_pallas_call(T, Bp, TB, Ip, Hp, h0.dtype, vmem_limit,
                               single_buffer_weights=True)(*args)
    except Exception:
        # Fallback for JAX versions without per-BlockSpec pipeline_mode.
        out = _gru_pallas_call(T, Bp, TB, Ip, Hp, h0.dtype, vmem_limit,
                               single_buffer_weights=False)(*args)

    if Bp != B or Hp != H:
        out = out[:, :B, :H]
    return out


def gru_cell(x, h, prep):
    """Single GRU step (the module's forward).  x: (B, I), h: (B, H).
    For recurrent use prefer gru_sequence() so weights are fetched once."""
    return gru_sequence(x[None], h, prep)[0]


# ---------------------------------------------------------------------------
# Init + pure-JAX references
# ---------------------------------------------------------------------------
def init_params(key, input_size, hidden_size, dtype=jnp.float32):
    """torch.nn.Linear-style init: U(-1/sqrt(fan_in), 1/sqrt(fan_in))."""
    ks = jax.random.split(key, 9)
    kx = 1.0 / jnp.sqrt(input_size)
    kh = 1.0 / jnp.sqrt(hidden_size)
    u = lambda k, shape, bound: jax.random.uniform(
        k, shape, dtype=dtype, minval=-bound, maxval=bound)
    return {
        # torch Linear weight shape: (out_features, in_features)
        "W_xr": u(ks[0], (hidden_size, input_size), kx),
        "W_xz": u(ks[1], (hidden_size, input_size), kx),
        "W_xn": u(ks[2], (hidden_size, input_size), kx),
        "b_xr": u(ks[3], (hidden_size,), kx),
        "b_xz": u(ks[4], (hidden_size,), kx),
        "b_xn": u(ks[5], (hidden_size,), kx),
        "W_hr": u(ks[6], (hidden_size, hidden_size), kh),
        "W_hz": u(ks[7], (hidden_size, hidden_size), kh),
        "W_hn": u(ks[8], (hidden_size, hidden_size), kh),
    }


def gru_cell_ref(x, h, p):
    """Pure-JAX reference identical to the PyTorch module's forward."""
    lin = lambda a, W, b=None: a @ W.T + (b if b is not None else 0.0)
    r = jax.nn.sigmoid(lin(x, p["W_xr"], p["b_xr"]) + lin(h, p["W_hr"]))
    z = jax.nn.sigmoid(lin(x, p["W_xz"], p["b_xz"]) + lin(h, p["W_hz"]))
    g = jnp.tanh(lin(x, p["W_xn"], p["b_xn"]) + lin(r * h, p["W_hn"]))
    return z * h + (1.0 - z) * g


def gru_sequence_ref(xs, h0, p):
    def step(h, x):
        hn = gru_cell_ref(x, h, p)
        return hn, hn
    _, ys = jax.lax.scan(step, h0, xs)
    return ys


# ---------------------------------------------------------------------------
# Demo / correctness check
# ---------------------------------------------------------------------------
if __name__ == "__main__":
    key = jax.random.PRNGKey(0)
    k_p, k_x, k_h, k_seq = jax.random.split(key, 4)

    B, INPUT, HIDDEN, T = 2, 16, 32, 8
    params = init_params(k_p, INPUT, HIDDEN)
    x = jax.random.normal(k_x, (B, INPUT), dtype=jnp.float32)
    h = jax.random.normal(k_h, (B, HIDDEN), dtype=jnp.float32)
    xs = jax.random.normal(k_seq, (T, B, INPUT), dtype=jnp.float32)

    # ---- single step (the module's forward) ----
    ref = gru_cell_ref(x, h, params)

    prep_f32 = prepare_params(params, weight_dtype=jnp.float32)
    out_f32 = jax.block_until_ready(gru_cell(x, h, prep_f32))
    assert out_f32.shape == (B, HIDDEN)
    assert jnp.allclose(out_f32, ref, atol=1e-4, rtol=1e-4), "f32 step mismatch"

    prep_bf16 = prepare_params(params, weight_dtype=jnp.bfloat16)
    out_bf16 = jax.block_until_ready(gru_cell(x, h, prep_bf16))
    assert out_bf16.shape == (B, HIDDEN)
    assert jnp.allclose(out_bf16, ref, atol=5e-2, rtol=5e-2), "bf16 step mismatch"

    # ---- sequence: T steps inside one kernel, weights fetched once ----
    seq_ref = gru_sequence_ref(xs, h, params)

    seq_f32 = jax.block_until_ready(gru_sequence(xs, h, prep_f32))
    assert seq_f32.shape == (T, B, HIDDEN)
    assert jnp.allclose(seq_f32, seq_ref, atol=1e-3, rtol=1e-3), "f32 seq mismatch"

    seq_bf16 = jax.block_until_ready(gru_sequence(xs, h, prep_bf16))
    assert jnp.allclose(seq_bf16, seq_ref, atol=1.5e-1, rtol=1.5e-1), "bf16 seq mismatch"

    print("KERNEL_OK")
</pallas_src>

<mosaic_0001>
module attributes {stable_mosaic.version = 11 : i64} {
  func.func @_gru_seq_kernel(%arg0: i32, %arg1: i32, %arg2: memref<1x8x128xf32, #tpu.memory_space<vmem>>, %arg3: memref<8x128xf32, #tpu.memory_space<vmem>>, %arg4: memref<128x384xf32, #tpu.memory_space<vmem>>, %arg5: memref<128x256xf32, #tpu.memory_space<vmem>>, %arg6: memref<128x128xf32, #tpu.memory_space<vmem>>, %arg7: memref<1x384xf32, #tpu.memory_space<vmem>>, %arg8: memref<1x8x128xf32, #tpu.memory_space<vmem>>, %arg9: memref<8x128xf32, #tpu.memory_space<vmem>>) attributes {dimension_semantics = [#tpu.dimension_semantics<parallel>, #tpu.dimension_semantics<arbitrary>], iteration_bounds = array<i64: 1, 1>, scalar_prefetch = 0 : i64, scratch_operands = 1 : i64, tpu.core_type = #tpu.core_type<tc>, window_params = [{transform_indices = @transform_0, window_bounds = array<i64: 1, 8, 128>}, {transform_indices = @transform_1, window_bounds = array<i64: 8, 128>}, {pipeline_mode = #tpu.pipeline_mode<synchronous>, transform_indices = @transform_2, window_bounds = array<i64: 128, 384>}, {pipeline_mode = #tpu.pipeline_mode<synchronous>, transform_indices = @transform_3, window_bounds = array<i64: 128, 256>}, {pipeline_mode = #tpu.pipeline_mode<synchronous>, transform_indices = @transform_4, window_bounds = array<i64: 128, 128>}, {pipeline_mode = #tpu.pipeline_mode<synchronous>, transform_indices = @transform_5, window_bounds = array<i64: 1, 384>}, {transform_indices = @transform_6, window_bounds = array<i64: 1, 8, 128>}]} {
    %c0_i32 = arith.constant 0 : i32
    %0 = arith.cmpi eq, %arg1, %c0_i32 : i32
    %1 = arith.extui %0 : i1 to i32
    %c0_i32_0 = arith.constant 0 : i32
    %2 = arith.cmpi ne, %1, %c0_i32_0 : i32
    scf.if %2 {
      %c0_23 = arith.constant 0 : index
      %c0_24 = arith.constant 0 : index
      %44 = vector.load %arg3[%c0_23, %c0_24] : memref<8x128xf32, #tpu.memory_space<vmem>>, vector<8x128xf32>
      %c0_25 = arith.constant 0 : index
      %c0_26 = arith.constant 0 : index
      %45 = vector.load %arg9[%c0_25, %c0_26] : memref<8x128xf32, #tpu.memory_space<vmem>>, vector<8x128xf32>
      tpu.vector_store %arg9[%c0_25, %c0_26], %44 {strides = array<i32>} : memref<8x128xf32, #tpu.memory_space<vmem>>, vector<8x128xf32>,
    } else {
    }
    %c0 = arith.constant 0 : index
    %c0_1 = arith.constant 0 : index
    %3 = vector.load %arg9[%c0, %c0_1] : memref<8x128xf32, #tpu.memory_space<vmem>>, vector<8x128xf32>
    %c0_2 = arith.constant 0 : index
    %c0_3 = arith.constant 0 : index
    %c0_4 = arith.constant 0 : index
    %4 = vector.load %arg2[%c0_2, %c0_3, %c0_4] : memref<1x8x128xf32, #tpu.memory_space<vmem>>, vector<1x8x128xf32>
    %5 = vector.shape_cast %4 : vector<1x8x128xf32> to vector<8x128xf32>
    %c0_5 = arith.constant 0 : index
    %c0_6 = arith.constant 0 : index
    %6 = vector.load %arg4[%c0_5, %c0_6] : memref<128x384xf32, #tpu.memory_space<vmem>>, vector<128x384xf32>
    %cst = arith.constant dense<0.000000e+00> : vector<8x384xf32>
    %7 = tpu.matmul %5, %6, %cst {dimension_numbers = #tpu.dot_dimension_numbers<[1], [0], [0], [1], [0, 0, 1, 1], [], []>} : vector<8x128xf32>, vector<128x384xf32>, vector<8x384xf32> -> vector<8x384xf32>
    %c0_7 = arith.constant 0 : index
    %c0_8 = arith.constant 0 : index
    %8 = vector.load %arg7[%c0_7, %c0_8] : memref<1x384xf32, #tpu.memory_space<vmem>>, vector<1x384xf32>
    %9 = vector.broadcast %8 : vector<1x384xf32> to vector<8x384xf32>
    %10 = arith.addf %7, %9 : vector<8x384xf32>
    %c0_9 = arith.constant 0 : index
    %c0_10 = arith.constant 0 : index
    %11 = vector.load %arg5[%c0_9, %c0_10] : memref<128x256xf32, #tpu.memory_space<vmem>>, vector<128x256xf32>
    %cst_11 = arith.constant dense<0.000000e+00> : vector<8x256xf32>
    %12 = tpu.matmul %3, %11, %cst_11 {dimension_numbers = #tpu.dot_dimension_numbers<[1], [0], [0], [1], [0, 0, 1, 1], [], []>} : vector<8x128xf32>, vector<128x256xf32>, vector<8x256xf32> -> vector<8x256xf32>
    %13 = vector.extract_strided_slice %10 {offsets = [0, 0], sizes = [8, 128], strides = [1, 1]} : vector<8x384xf32> to vector<8x128xf32>
    %14 = vector.extract_strided_slice %12 {offsets = [0, 0], sizes = [8, 128], strides = [1, 1]} : vector<8x256xf32> to vector<8x128xf32>
    %15 = arith.addf %13, %14 : vector<8x128xf32>
    %16 = arith.negf %15 : vector<8x128xf32>
    %17 = math.exp %16 : vector<8x128xf32>
    %cst_12 = arith.constant 1.000000e+00 : f32
    %18 = vector.broadcast %cst_12 : f32 to vector<8x128xf32>
    %19 = arith.addf %18, %17 : vector<8x128xf32>
    %20 = arith.divf %18, %19 : vector<8x128xf32>
    %21 = vector.extract_strided_slice %10 {offsets = [0, 128], sizes = [8, 128], strides = [1, 1]} : vector<8x384xf32> to vector<8x128xf32>
    %22 = vector.extract_strided_slice %12 {offsets = [0, 128], sizes = [8, 128], strides = [1, 1]} : vector<8x256xf32> to vector<8x128xf32>
    %23 = arith.addf %21, %22 : vector<8x128xf32>
    %24 = arith.negf %23 : vector<8x128xf32>
    %25 = math.exp %24 : vector<8x128xf32>
    %cst_13 = arith.constant 1.000000e+00 : f32
    %26 = vector.broadcast %cst_13 : f32 to vector<8x128xf32>
    %27 = arith.addf %26, %25 : vector<8x128xf32>
    %28 = arith.divf %26, %27 : vector<8x128xf32>
    %29 = arith.mulf %20, %3 : vector<8x128xf32>
    %30 = vector.extract_strided_slice %10 {offsets = [0, 256], sizes = [8, 128], strides = [1, 1]} : vector<8x384xf32> to vector<8x128xf32>
    %c0_14 = arith.constant 0 : index
    %c0_15 = arith.constant 0 : index
    %31 = vector.load %arg6[%c0_14, %c0_15] : memref<128x128xf32, #tpu.memory_space<vmem>>, vector<128x128xf32>
    %cst_16 = arith.constant dense<0.000000e+00> : vector<8x128xf32>
    %32 = tpu.matmul %29, %31, %cst_16 {dimension_numbers = #tpu.dot_dimension_numbers<[1], [0], [0], [1], [0, 0, 1, 1], [], []>} : vector<8x128xf32>, vector<128x128xf32>, vector<8x128xf32> -> vector<8x128xf32>
    %33 = arith.addf %30, %32 : vector<8x128xf32>
    %34 = math.tanh %33 : vector<8x128xf32>
    %35 = arith.mulf %28, %3 : vector<8x128xf32>
    %cst_17 = arith.constant 1.000000e+00 : f32
    %36 = vector.broadcast %cst_17 : f32 to vector<8x128xf32>
    %37 = arith.subf %36, %28 : vector<8x128xf32>
    %38 = arith.mulf %37, %34 : vector<8x128xf32>
    %39 = arith.addf %35, %38 : vector<8x128xf32>
    %c0_18 = arith.constant 0 : index
    %c0_19 = arith.constant 0 : index
    %40 = vector.load %arg9[%c0_18, %c0_19] : memref<8x128xf32, #tpu.memory_space<vmem>>, vector<8x128xf32>
    tpu.vector_store %arg9[%c0_18, %c0_19], %39 {strides = array<i32>} : memref<8x128xf32, #tpu.memory_space<vmem>>, vector<8x128xf32>,
    %c0_20 = arith.constant 0 : index
    %c0_21 = arith.constant 0 : index
    %c0_22 = arith.constant 0 : index
    %41 = vector.load %arg8[%c0_20, %c0_21, %c0_22] : memref<1x8x128xf32, #tpu.memory_space<vmem>>, vector<1x8x128xf32>
    %42 = vector.shape_cast %41 : vector<1x8x128xf32> to vector<8x128xf32>
    %43 = vector.shape_cast %39 : vector<8x128xf32> to vector<1x8x128xf32>
    tpu.vector_store %arg8[%c0_20, %c0_21, %c0_22], %43 {strides = array<i32>} : memref<1x8x128xf32, #tpu.memory_space<vmem>>, vector<1x8x128xf32>,
    return
  }
  func.func @transform_0(%arg0: i32, %arg1: i32) -> (i32, i32, i32) {
    %c0_i32 = arith.constant 0 : i32
    %c0_i32_0 = arith.constant 0 : i32
    return %arg1, %arg0, %c0_i32 : i32, i32, i32
  }
  func.func @transform_1(%arg0: i32, %arg1: i32) -> (i32, i32) {
    %c0_i32 = arith.constant 0 : i32
    %c0_i32_0 = arith.constant 0 : i32
    return %arg0, %c0_i32 : i32, i32
  }
  func.func @transform_2(%arg0: i32, %arg1: i32) -> (i32, i32) {
    %c0_i32 = arith.constant 0 : i32
    %c0_i32_0 = arith.constant 0 : i32
    %c0_i32_1 = arith.constant 0 : i32
    return %c0_i32, %c0_i32_0 : i32, i32
  }
  func.func @transform_3(%arg0: i32, %arg1: i32) -> (i32, i32) {
    %c0_i32 = arith.constant 0 : i32
    %c0_i32_0 = arith.constant 0 : i32
    %c0_i32_1 = arith.constant 0 : i32
    return %c0_i32, %c0_i32_0 : i32, i32
  }
  func.func @transform_4(%arg0: i32, %arg1: i32) -> (i32, i32) {
    %c0_i32 = arith.constant 0 : i32
    %c0_i32_0 = arith.constant 0 : i32
    %c0_i32_1 = arith.constant 0 : i32
    return %c0_i32, %c0_i32_0 : i32, i32
  }
  func.func @transform_5(%arg0: i32, %arg1: i32) -> (i32, i32) {
    %c0_i32 = arith.constant 0 : i32
    %c0_i32_0 = arith.constant 0 : i32
    %c0_i32_1 = arith.constant 0 : i32
    return %c0_i32, %c0_i32_0 : i32, i32
  }
  func.func @transform_6(%arg0: i32, %arg1: i32) -> (i32, i32, i32) {
    %c0_i32 = arith.constant 0 : i32
    %c0_i32_0 = arith.constant 0 : i32
    return %arg1, %arg0, %c0_i32 : i32, i32, i32
  }
}

module attributes {stable_mosaic.version = 11 : i64} {
  func.func @_gru_seq_kernel(%arg0: i32, %arg1: i32, %arg2: memref<1x8x128xf32, #tpu.memory_space<vmem>>, %arg3: memref<8x128xf32, #tpu.memory_space<vmem>>, %arg4: memref<128x384xf32, #tpu.memory_space<vmem>>, %arg5: memref<128x256xf32, #tpu.memory_space<vmem>>, %arg6: memref<128x128xf32, #tpu.memory_space<vmem>>, %arg7: memref<1x384xf32, #tpu.memory_space<vmem>>, %arg8: memref<1x8x128xf32, #tpu.memory_space<vmem>>, %arg9: memref<8x128xf32, #tpu.memory_space<vmem>>) attributes {dimension_semantics = [#tpu.dimension_semantics<parallel>, #tpu.dimension_semantics<arbitrary>], iteration_bounds = array<i64: 1, 1>, scalar_prefetch = 0 : i64, scratch_operands = 1 : i64, tpu.core_type = #tpu.core_type<tc>, window_params = [{transform_indices = @transform_0, window_bounds = array<i64: 1, 8, 128>}, {transform_indices = @transform_1, window_bounds = array<i64: 8, 128>}, {pipeline_mode = #tpu.pipeline_mode<synchronous>, transform_indices = @transform_2, window_bounds = array<i64: 128, 384>}, {pipeline_mode = #tpu.pipeline_mode<synchronous>, transform_indices = @transform_3, window_bounds = array<i64: 128, 256>}, {pipeline_mode = #tpu.pipeline_mode<synchronous>, transform_indices = @transform_4, window_bounds = array<i64: 128, 128>}, {pipeline_mode = #tpu.pipeline_mode<synchronous>, transform_indices = @transform_5, window_bounds = array<i64: 1, 384>}, {transform_indices = @transform_6, window_bounds = array<i64: 1, 8, 128>}]} {
    %c0_i32 = arith.constant 0 : i32
    %0 = arith.cmpi eq, %arg1, %c0_i32 : i32
    %1 = arith.extui %0 : i1 to i32
    %c0_i32_0 = arith.constant 0 : i32
    %2 = arith.cmpi ne, %1, %c0_i32_0 : i32
    scf.if %2 {
      %c0_23 = arith.constant 0 : index
      %c0_24 = arith.constant 0 : index
      %44 = vector.load %arg3[%c0_23, %c0_24] : memref<8x128xf32, #tpu.memory_space<vmem>>, vector<8x128xf32>
      %c0_25 = arith.constant 0 : index
      %c0_26 = arith.constant 0 : index
      %45 = vector.load %arg9[%c0_25, %c0_26] : memref<8x128xf32, #tpu.memory_space<vmem>>, vector<8x128xf32>
      tpu.vector_store %arg9[%c0_25, %c0_26], %44 {strides = array<i32>} : memref<8x128xf32, #tpu.memory_space<vmem>>, vector<8x128xf32>,
    } else {
    }
    %c0 = arith.constant 0 : index
    %c0_1 = arith.constant 0 : index
    %3 = vector.load %arg9[%c0, %c0_1] : memref<8x128xf32, #tpu.memory_space<vmem>>, vector<8x128xf32>
    %c0_2 = arith.constant 0 : index
    %c0_3 = arith.constant 0 : index
    %c0_4 = arith.constant 0 : index
    %4 = vector.load %arg2[%c0_2, %c0_3, %c0_4] : memref<1x8x128xf32, #tpu.memory_space<vmem>>, vector<1x8x128xf32>
    %5 = vector.shape_cast %4 : vector<1x8x128xf32> to vector<8x128xf32>
    %c0_5 = arith.constant 0 : index
    %c0_6 = arith.constant 0 : index
    %6 = vector.load %arg4[%c0_5, %c0_6] : memref<128x384xf32, #tpu.memory_space<vmem>>, vector<128x384xf32>
    %cst = arith.constant dense<0.000000e+00> : vector<8x384xf32>
    %7 = tpu.matmul %5, %6, %cst {dimension_numbers = #tpu.dot_dimension_numbers<[1], [0], [0], [1], [0, 0, 1, 1], [], []>} : vector<8x128xf32>, vector<128x384xf32>, vector<8x384xf32> -> vector<8x384xf32>
    %c0_7 = arith.constant 0 : index
    %c0_8 = arith.constant 0 : index
    %8 = vector.load %arg7[%c0_7, %c0_8] : memref<1x384xf32, #tpu.memory_space<vmem>>, vector<1x384xf32>
    %9 = vector.broadcast %8 : vector<1x384xf32> to vector<8x384xf32>
    %10 = arith.addf %7, %9 : vector<8x384xf32>
    %c0_9 = arith.constant 0 : index
    %c0_10 = arith.constant 0 : index
    %11 = vector.load %arg5[%c0_9, %c0_10] : memref<128x256xf32, #tpu.memory_space<vmem>>, vector<128x256xf32>
    %cst_11 = arith.constant dense<0.000000e+00> : vector<8x256xf32>
    %12 = tpu.matmul %3, %11, %cst_11 {dimension_numbers = #tpu.dot_dimension_numbers<[1], [0], [0], [1], [0, 0, 1, 1], [], []>} : vector<8x128xf32>, vector<128x256xf32>, vector<8x256xf32> -> vector<8x256xf32>
    %13 = vector.extract_strided_slice %10 {offsets = [0, 0], sizes = [8, 128], strides = [1, 1]} : vector<8x384xf32> to vector<8x128xf32>
    %14 = vector.extract_strided_slice %12 {offsets = [0, 0], sizes = [8, 128], strides = [1, 1]} : vector<8x256xf32> to vector<8x128xf32>
    %15 = arith.addf %13, %14 : vector<8x128xf32>
    %16 = arith.negf %15 : vector<8x128xf32>
    %17 = math.exp %16 : vector<8x128xf32>
    %cst_12 = arith.constant 1.000000e+00 : f32
    %18 = vector.broadcast %cst_12 : f32 to vector<8x128xf32>
    %19 = arith.addf %18, %17 : vector<8x128xf32>
    %20 = arith.divf %18, %19 : vector<8x128xf32>
    %21 = vector.extract_strided_slice %10 {offsets = [0, 128], sizes = [8, 128], strides = [1, 1]} : vector<8x384xf32> to vector<8x128xf32>
    %22 = vector.extract_strided_slice %12 {offsets = [0, 128], sizes = [8, 128], strides = [1, 1]} : vector<8x256xf32> to vector<8x128xf32>
    %23 = arith.addf %21, %22 : vector<8x128xf32>
    %24 = arith.negf %23 : vector<8x128xf32>
    %25 = math.exp %24 : vector<8x128xf32>
    %cst_13 = arith.constant 1.000000e+00 : f32
    %26 = vector.broadcast %cst_13 : f32 to vector<8x128xf32>
    %27 = arith.addf %26, %25 : vector<8x128xf32>
    %28 = arith.divf %26, %27 : vector<8x128xf32>
    %29 = arith.mulf %20, %3 : vector<8x128xf32>
    %30 = vector.extract_strided_slice %10 {offsets = [0, 256], sizes = [8, 128], strides = [1, 1]} : vector<8x384xf32> to vector<8x128xf32>
    %c0_14 = arith.constant 0 : index
    %c0_15 = arith.constant 0 : index
    %31 = vector.load %arg6[%c0_14, %c0_15] : memref<128x128xf32, #tpu.memory_space<vmem>>, vector<128x128xf32>
    %cst_16 = arith.constant dense<0.000000e+00> : vector<8x128xf32>
    %32 = tpu.matmul %29, %31, %cst_16 {dimension_numbers = #tpu.dot_dimension_numbers<[1], [0], [0], [1], [0, 0, 1, 1], [], []>} : vector<8x128xf32>, vector<128x128xf32>, vector<8x128xf32> -> vector<8x128xf32>
    %33 = arith.addf %30, %32 : vector<8x128xf32>
    %34 = math.tanh %33 : vector<8x128xf32>
    %35 = arith.mulf %28, %3 : vector<8x128xf32>
    %cst_17 = arith.constant 1.000000e+00 : f32
    %36 = vector.broadcast %cst_17 : f32 to vector<8x128xf32>
    %37 = arith.subf %36, %28 : vector<8x128xf32>
    %38 = arith.mulf %37, %34 : vector<8x128xf32>
    %39 = arith.addf %35, %38 : vector<8x128xf32>
    %c0_18 = arith.constant 0 : index
    %c0_19 = arith.constant 0 : index
    %40 = vector.load %arg9[%c0_18, %c0_19] : memref<8x128xf32, #tpu.memory_space<vmem>>, vector<8x128xf32>
    tpu.vector_store %arg9[%c0_18, %c0_19], %39 {strides = array<i32>} : memref<8x128xf32, #tpu.memory_space<vmem>>, vector<8x128xf32>,
    %c0_20 = arith.constant 0 : index
    %c0_21 = arith.constant 0 : index
    %c0_22 = arith.constant 0 : index
    %41 = vector.load %arg8[%c0_20, %c0_21, %c0_22] : memref<1x8x128xf32, #tpu.memory_space<vmem>>, vector<1x8x128xf32>
    %42 = vector.shape_cast %41 : vector<1x8x128xf32> to vector<8x128xf32>
    %43 = vector.shape_cast %39 : vector<8x128xf32> to vector<1x8x128xf32>
    tpu.vector_store %arg8[%c0_20, %c0_21, %c0_22], %43 {strides = array<i32>} : memref<1x8x128xf32, #tpu.memory_space<vmem>>, vector<1x8x128xf32>,
    return
  }
  func.func @transform_0(%arg0: i32, %arg1: i32) -> (i32, i32, i32) {
    %c0_i32 = arith.constant 0 : i32
    %c0_i32_0 = arith.constant 0 : i32
    return %arg1, %arg0, %c0_i32 : i32, i32, i32
  }
  func.func @transform_1(%arg0: i32, %arg1: i32) -> (i32, i32) {
    %c0_i32 = arith.constant 0 : i32
    %c0_i32_0 = arith.constant 0 : i32
    return %arg0, %c0_i32 : i32, i32
  }
  func.func @transform_2(%arg0: i32, %arg1: i32) -> (i32, i32) {
    %c0_i32 = arith.constant 0 : i32
    %c0_i32_0 = arith.constant 0 : i32
    %c0_i32_1 = arith.constant 0 : i32
    return %c0_i32, %c0_i32_0 : i32, i32
  }
  func.func @transform_3(%arg0: i32, %arg1: i32) -> (i32, i32) {
    %c0_i32 = arith.constant 0 : i32
    %c0_i32_0 = arith.constant 0 : i32
    %c0_i32_1 = arith.constant 0 : i32
    return %c0_i32, %c0_i32_0 : i32, i32
  }
  func.func @transform_4(%arg0: i32, %arg1: i32) -> (i32, i32) {
    %c0_i32 = arith.constant 0 : i32
    %c0_i32_0 = arith.constant 0 : i32
    %c0_i32_1 = arith.constant 0 : i32
    return %c0_i32, %c0_i32_0 : i32, i32
  }
  func.func @transform_5(%arg0: i32, %arg1: i32) -> (i32, i32) {
    %c0_i32 = arith.constant 0 : i32
    %c0_i32_0 = arith.constant 0 : i32
    %c0_i32_1 = arith.constant 0 : i32
    return %c0_i32, %c0_i32_0 : i32, i32
  }
  func.func @transform_6(%arg0: i32, %arg1: i32) -> (i32, i32, i32) {
    %c0_i32 = arith.constant 0 : i32
    %c0_i32_0 = arith.constant 0 : i32
    return %arg1, %arg0, %c0_i32 : i32, i32, i32
  }
}

</mosaic_0001>

<llo_original>
// kernel: tpu_custom_call.1
$region0: #{tpu_custom_call.1}
  #allocation0 [shape = 'u32[]', space=smem, size = 0x4, offset = 0x4, fixed_abs, tag = 'smem constant byte address 0x4 - core index']
  #allocation1 [shape = 'u32[144,128]{1,0:T(1,128)}', space=vmem, size = 0x12000, scoped, tag = 'internal scratch']
  #allocation2 [shape = 'f32[8,128]{1,0:T(8,128)}', space=vmem, size = 0x1000, scoped, tag = 'scratch operand']
  %s0 = inlined_call_operand.hbm [shape: f32[1,8,128], index: 0, kind: input, shape index: {}]
  %s1 = inlined_call_operand.hbm [shape: f32[8,128], index: 1, kind: input, shape index: {}]
  %s2 = inlined_call_operand.hbm [shape: f32[128,384], index: 2, kind: input, shape index: {}]
  %s3 = inlined_call_operand.hbm [shape: f32[128,256], index: 3, kind: input, shape index: {}]
  %s4 = inlined_call_operand.hbm [shape: f32[128,128], index: 4, kind: input, shape index: {}]
  %s5 = inlined_call_operand.vmem [shape: f32[1,384], index: 5, kind: input, shape index: {}]
  %s6 = inlined_call_operand.hbm [shape: f32[1,8,128], index: 6, kind: output, shape index: {}]
  %s7 = sld [smem:[#allocation0]]
  $region58: #{tpu_custom_call.1} parent=0
    _
  %s9 = ssub.s32 1, %s7
  %s10 = scalar_select 0, %s9, %s7
  $region1: #{tpu_custom_call.1} parent=0
    #allocation3 [shape = 'u8[4096]{0}', space=vmem, size = 0x1000, scoped, tag = 'input window, operand 0, single buffered']
    #allocation4 [shape = 's32[1]{0}', space=sflag, size = 0x4, scoped, tag = 'scoped memory for tpu_custom_call.1']
    #allocation5 [shape = 's32[1]{0}', space=sflag, size = 0x4, scoped, tag = 'scoped memory for tpu_custom_call.1']
    #allocation6 [shape = 'u8[4096]{0}', space=vmem, size = 0x1000, scoped, tag = 'input window, operand 1, single buffered']
    #allocation7 [shape = 's32[1]{0}', space=sflag, size = 0x4, scoped, tag = 'scoped memory for tpu_custom_call.1']
    #allocation8 [shape = 'u8[196608]{0}', space=vmem, size = 0x30000, scoped, tag = 'input window, operand 2, single buffered']
    #allocation9 [shape = 'u8[131072]{0}', space=vmem, size = 0x20000, scoped, tag = 'input window, operand 3, single buffered']
    #allocation10 [shape = 's32[1]{0}', space=sflag, size = 0x4, scoped, tag = 'scoped memory for tpu_custom_call.1']
    #allocation11 [shape = 'u8[65536]{0}', space=vmem, size = 0x10000, scoped, tag = 'input window, operand 4, single buffered']
    #allocation12 [shape = 'u8[4096]{0}', space=vmem, size = 0x1000, scoped, tag = 'output window, operand 0, single buffered']
    %11 = vsyncpa [#allocation4], 0
    %12 = vsyncpa [#allocation7], 0
    %13 = vsyncpa [#allocation10], 0
    %14 = vsyncpa [#allocation5], 0
    // Predicated region
    $region2: #{tpu_custom_call.1} parent=1 // pred_check
      _
    $region3: #{tpu_custom_call.1} parent=1 // pred_check_branch
      %16 = sbr.rel (0) target = $region5
    $region4: #{tpu_custom_call.1} parent=1 // pred_region
      %s18 = ssub.s32 128, 128
      %19 = vsyncadd [#allocation4], %s18
      %s21 = sshll.u32 [#allocation3], 4
      %s22 = int_to_ptr.vmem [resolvable:$true] %s21
      %24 = dma.hbm_to_vmem [thread:$0]  %s0, 128, %s22, [#allocation4]
    $region5: #{tpu_custom_call.1} parent=1 // pred_fallthru
      _
    // Predicated region
    $region6: #{tpu_custom_call.1} parent=1 // pred_check
      _
    $region7: #{tpu_custom_call.1} parent=1 // pred_check_branch
      %26 = sbr.rel (0) target = $region9
    $region8: #{tpu_custom_call.1} parent=1 // pred_region
      %s28 = ssub.s32 128, 128
      %29 = vsyncadd [#allocation7], %s28
      %s31 = sshll.u32 [#allocation6], 4
      %s32 = int_to_ptr.vmem [resolvable:$true] %s31
      %34 = dma.hbm_to_vmem [thread:$0]  %s1, 128, %s32, [#allocation7]
    $region9: #{tpu_custom_call.1} parent=1 // pred_fallthru
      _
    // Predicated region
    $region10: #{tpu_custom_call.1} parent=1 // pred_check
      _
    $region11: #{tpu_custom_call.1} parent=1 // pred_check_branch
      %36 = sbr.rel (0) target = $region13
    $region12: #{tpu_custom_call.1} parent=1 // pred_region
      %s38 = ssub.s32 6144, 6144
      %39 = vsyncadd [#allocation7], %s38
      %s40 = sshll.u32 [#allocation8], 4
      %s41 = int_to_ptr.vmem [resolvable:$true] %s40
      %46 = dma.hbm_to_vmem [thread:$0]  %s2, 6144, %s41, [#allocation7], 384, 384, 24
    $region13: #{tpu_custom_call.1} parent=1 // pred_fallthru
      _
    // Predicated region
    $region14: #{tpu_custom_call.1} parent=1 // pred_check
      _
    $region15: #{tpu_custom_call.1} parent=1 // pred_check_branch
      %48 = sbr.rel (0) target = $region17
    $region16: #{tpu_custom_call.1} parent=1 // pred_region
      %s50 = ssub.s32 4096, 4096
      %51 = vsyncadd [#allocation10], %s50
      %s52 = sshll.u32 [#allocation9], 4
      %s53 = int_to_ptr.vmem [resolvable:$true] %s52
      %58 = dma.hbm_to_vmem [thread:$0]  %s3, 4096, %s53, [#allocation10], 256, 256, 16
    $region17: #{tpu_custom_call.1} parent=1 // pred_fallthru
      _
    // Predicated region
    $region18: #{tpu_custom_call.1} parent=1 // pred_check
      _
    $region19: #{tpu_custom_call.1} parent=1 // pred_check_branch
      %60 = sbr.rel (0) target = $region21
    $region20: #{tpu_custom_call.1} parent=1 // pred_region
      %s62 = ssub.s32 2048, 2048
      %63 = vsyncadd [#allocation10], %s62
      %s64 = sshll.u32 [#allocation11], 4
      %s65 = int_to_ptr.vmem [resolvable:$true] %s64
      %70 = dma.hbm_to_vmem [thread:$0]  %s4, 2048, %s65, [#allocation10], 128, 128, 8
    $region21: #{tpu_custom_call.1} parent=1 // pred_fallthru
      _
    // Predicated region
    $region22: #{tpu_custom_call.1} parent=1 // pred_check
      _
    $region23: #{tpu_custom_call.1} parent=1 // pred_check_branch
      %72 = sbr.rel (0) target = $region25
    $region24: #{tpu_custom_call.1} parent=1 // pred_region
      _
    $region25: #{tpu_custom_call.1} parent=1 // pred_fallthru
      _
    // Predicated region
    $region26: #{tpu_custom_call.1} parent=1 // pred_check
      _
    $region27: #{tpu_custom_call.1} parent=1 // pred_check_branch
      %74 = sbr.rel (0) target = $region29
    $region28: #{tpu_custom_call.1} parent=1 // pred_region
      %75 = dma.done [#allocation4], 128
    $region29: #{tpu_custom_call.1} parent=1 // pred_fallthru
      _
    // Predicated region
    $region30: #{tpu_custom_call.1} parent=1 // pred_check
      _
    $region31: #{tpu_custom_call.1} parent=1 // pred_check_branch
      %77 = sbr.rel (0) target = $region33
    $region32: #{tpu_custom_call.1} parent=1 // pred_region
      %78 = dma.done [#allocation7], 128
    $region33: #{tpu_custom_call.1} parent=1 // pred_fallthru
      _
    // Predicated region
    $region34: #{tpu_custom_call.1} parent=1 // pred_check
      _
    $region35: #{tpu_custom_call.1} parent=1 // pred_check_branch
      %80 = sbr.rel (0) target = $region37
    $region36: #{tpu_custom_call.1} parent=1 // pred_region
      %81 = dma.done [#allocation7], 6144
    $region37: #{tpu_custom_call.1} parent=1 // pred_fallthru
      _
    // Predicated region
    $region38: #{tpu_custom_call.1} parent=1 // pred_check
      _
    $region39: #{tpu_custom_call.1} parent=1 // pred_check_branch
      %83 = sbr.rel (0) target = $region41
    $region40: #{tpu_custom_call.1} parent=1 // pred_region
      %84 = dma.done [#allocation10], 4096
    $region41: #{tpu_custom_call.1} parent=1 // pred_fallthru
      _
    // Predicated region
    $region42: #{tpu_custom_call.1} parent=1 // pred_check
      _
    $region43: #{tpu_custom_call.1} parent=1 // pred_check_branch
      %86 = sbr.rel (0) target = $region45
    $region44: #{tpu_custom_call.1} parent=1 // pred_region
      %87 = dma.done [#allocation10], 2048
    $region45: #{tpu_custom_call.1} parent=1 // pred_fallthru
      _
    %p88 = scmp.eq.s32.totalorder 0, 0
    // Predicated region
    $region46: #{tpu_custom_call.1} parent=1 // pred_check
      %p89 = pneg %p88
    $region47: #{tpu_custom_call.1} parent=1 // pred_check_branch
      %91 = sbr.rel (%p89) target = $region49
    $region48: #{tpu_custom_call.1} parent=1 // pred_region
      %v92 = vld [vmem:[#allocation6] sm:$0xff]
      %93 = vst [vmem:[#allocation2] sm:$0xff] %v92
    $region49: #{tpu_custom_call.1} parent=1 // pred_fallthru
      _
    %v94 = vld [vmem:[#allocation2] sm:$0xff]
    %v95 = vld [vmem:[#allocation3] sm:$0xff]
    %v96 = vld [vmem:[#allocation8] sm:$0xff]
    %v97 = vld [vmem:[#allocation8 + $0x8] sm:$0xff]
    %v98 = vld [vmem:[#allocation8 + $0x10] sm:$0xff]
    %v99 = vld [vmem:[#allocation8 + $0x18] sm:$0xff]
    %v100 = vld [vmem:[#allocation8 + $0x20] sm:$0xff]
    %v101 = vld [vmem:[#allocation8 + $0x28] sm:$0xff]
    %v102 = vld [vmem:[#allocation8 + $0x30] sm:$0xff]
    %v103 = vld [vmem:[#allocation8 + $0x38] sm:$0xff]
    %v104 = vld [vmem:[#allocation8 + $0x40] sm:$0xff]
    %v105 = vld [vmem:[#allocation8 + $0x48] sm:$0xff]
    %v106 = vld [vmem:[#allocation8 + $0x50] sm:$0xff]
    %v107 = vld [vmem:[#allocation8 + $0x58] sm:$0xff]
    %v108 = vld [vmem:[#allocation8 + $0x60] sm:$0xff]
    %v109 = vld [vmem:[#allocation8 + $0x68] sm:$0xff]
    %v110 = vld [vmem:[#allocation8 + $0x70] sm:$0xff]
    %v111 = vld [vmem:[#allocation8 + $0x78] sm:$0xff]
    %v112 = vld [vmem:[#allocation8 + $0x80] sm:$0xff]
    %v113 = vld [vmem:[#allocation8 + $0x88] sm:$0xff]
    %v114 = vld [vmem:[#allocation8 + $0x90] sm:$0xff]
    %v115 = vld [vmem:[#allocation8 + $0x98] sm:$0xff]
    %v116 = vld [vmem:[#allocation8 + $0xa0] sm:$0xff]
    %v117 = vld [vmem:[#allocation8 + $0xa8] sm:$0xff]
    %v118 = vld [vmem:[#allocation8 + $0xb0] sm:$0xff]
    %v119 = vld [vmem:[#allocation8 + $0xb8] sm:$0xff]
    %v120 = vld [vmem:[#allocation8 + $0xc0] sm:$0xff]
    %v121 = vld [vmem:[#allocation8 + $0xc8] sm:$0xff]
    %v122 = vld [vmem:[#allocation8 + $0xd0] sm:$0xff]
    %v123 = vld [vmem:[#allocation8 + $0xd8] sm:$0xff]
    %v124 = vld [vmem:[#allocation8 + $0xe0] sm:$0xff]
    %v125 = vld [vmem:[#allocation8 + $0xe8] sm:$0xff]
    %v126 = vld [vmem:[#allocation8 + $0xf0] sm:$0xff]
    %v127 = vld [vmem:[#allocation8 + $0xf8] sm:$0xff]
    %v128 = vld [vmem:[#allocation8 + $0x100] sm:$0xff]
    %v129 = vld [vmem:[#allocation8 + $0x108] sm:$0xff]
    %v130 = vld [vmem:[#allocation8 + $0x110] sm:$0xff]
    %v131 = vld [vmem:[#allocation8 + $0x118] sm:$0xff]
    %v132 = vld [vmem:[#allocation8 + $0x120] sm:$0xff]
    %v133 = vld [vmem:[#allocation8 + $0x128] sm:$0xff]
    %v134 = vld [vmem:[#allocation8 + $0x130] sm:$0xff]
    %v135 = vld [vmem:[#allocation8 + $0x138] sm:$0xff]
    %v136 = vld [vmem:[#allocation8 + $0x140] sm:$0xff]
    %v137 = vld [vmem:[#allocation8 + $0x148] sm:$0xff]
    %v138 = vld [vmem:[#allocation8 + $0x150] sm:$0xff]
    %v139 = vld [vmem:[#allocation8 + $0x158] sm:$0xff]
    %v140 = vld [vmem:[#allocation8 + $0x160] sm:$0xff]
    %v141 = vld [vmem:[#allocation8 + $0x168] sm:$0xff]
    %v142 = vld [vmem:[#allocation8 + $0x170] sm:$0xff]
    %v143 = vld [vmem:[#allocation8 + $0x178] sm:$0xff]
    %v144 = vld [vmem:[%s5] sm:$0x7]
    %v146 = vlaneseq
    %v147 = vshrl.u32 %v146, 7
    %v148 = vsub.s32 0, %v147
    %v149 = vrot.slane %v144, %v148
    %v150 = vlaneseq
    %v151 = vshrl.u32 %v150, 7
    %v152 = vsub.s32 1, %v151
    %v153 = vrot.slane %v144, %v152
    %v154 = vlaneseq
    %v155 = vshrl.u32 %v154, 7
    %v156 = vsub.s32 2, %v155
    %v157 = vrot.slane %v144, %v156
    %161 = vmatprep.subr.mxu0 %v97
    %162 = vmatpush1.msra.mxu0 %v96
    %163 = vmatprep.subr.mxu0 %v100
    %164 = vmatpush1.msra.mxu0 %v99
    %165 = vmatprep.subr.mxu0 %v103
    %166 = vmatpush1.msra.mxu0 %v102
    %167 = vmatprep.subr.mxu0 %v106
    %168 = vmatpush1.msra.mxu0 %v105
    %169 = vmatprep.subr.mxu0 %v109
    %170 = vmatpush1.msra.mxu0 %v108
    %171 = vmatprep.subr.mxu0 %v112
    %172 = vmatpush1.msra.mxu0 %v111
    %173 = vmatprep.subr.mxu0 %v115
    %174 = vmatpush1.msra.mxu0 %v114
    %175 = vmatprep.subr.mxu0 %v118
    %176 = vmatpush1.msra.mxu0 %v117
    %177 = vmatprep.subr.mxu0 %v121
    %178 = vmatpush1.msra.mxu0 %v120
    %179 = vmatprep.subr.mxu0 %v124
    %180 = vmatpush1.msra.mxu0 %v123
    %181 = vmatprep.subr.mxu0 %v127
    %182 = vmatpush1.msra.mxu0 %v126
    %183 = vmatprep.subr.mxu0 %v130
    %184 = vmatpush1.msra.mxu0 %v129
    %185 = vmatprep.subr.mxu0 %v133
    %186 = vmatpush1.msra.mxu0 %v132
    %187 = vmatprep.subr.mxu0 %v136
    %188 = vmatpush1.msra.mxu0 %v135
    %189 = vmatprep.subr.mxu0 %v139
    %190 = vmatpush1.msra.mxu0 %v138
    %191 = vmatprep.subr.mxu0 %v142
    %192 = vmatpush1.msra.mxu0 %v141
    %193 = vmatprep.subr.mxu0 0.0
    %194 = vmatpush1.msra.mxu0 0.0
    %195 = vmatprep.subr.mxu0 0.0
    %196 = vmatpush1.msra.mxu0 0.0
    %197 = vmatprep.subr.mxu0 0.0
    %198 = vmatpush1.msra.mxu0 0.0
    %199 = vmatprep.subr.mxu0 0.0
    %200 = vmatpush1.msra.mxu0 0.0
    %201 = vmatprep.subr.mxu0 0.0
    %202 = vmatpush1.msra.mxu0 0.0
    %203 = vmatprep.subr.mxu0 0.0
    %204 = vmatpush1.msra.mxu0 0.0
    %205 = vmatprep.subr.mxu0 0.0
    %206 = vmatpush1.msra.mxu0 0.0
    %207 = vmatprep.subr.mxu0 0.0
    %208 = vmatpush1.msra.mxu0 0.0
    %209 = vmatprep.subr.mxu0 0.0
    %210 = vmatpush1.msra.mxu0 0.0
    %211 = vmatprep.subr.mxu0 0.0
    %212 = vmatpush1.msra.mxu0 0.0
    %213 = vmatprep.subr.mxu0 0.0
    %214 = vmatpush1.msra.mxu0 0.0
    %215 = vmatprep.subr.mxu0 0.0
    %216 = vmatpush1.msra.mxu0 0.0
    %217 = vmatprep.subr.mxu0 0.0
    %218 = vmatpush1.msra.mxu0 0.0
    %219 = vmatprep.subr.mxu0 0.0
    %220 = vmatpush1.msra.mxu0 0.0
    %221 = vmatprep.subr.mxu0 0.0
    %222 = vmatpush1.msra.mxu0 0.0
    %223 = vmatprep.subr.mxu0 0.0
    %224 = vmatpush1.msra.mxu0 0.0
    %225 = vmatprep.mubr.f32.mxu0 0.0
    %226 = vmatmul.mubr.f32.gmra.mrb[0].mxu0 %v95
    %v227 = vpop.f32.mrb[0].mxu0
    %v228 = vadd.f32 %v149, %v227
    %v229 = vpop.f32.mrb[0].mxu0
    %v230 = vadd.f32 %v153, %v229
    %231 = vdwg.mxu0
    %232 = vmatprep.subr.mxu0 0.0
    %233 = vmatpush1.msra.mxu0 %v98
    %234 = vmatprep.subr.mxu0 0.0
    %235 = vmatpush1.msra.mxu0 %v101
    %236 = vmatprep.subr.mxu0 0.0
    %237 = vmatpush1.msra.mxu0 %v104
    %238 = vmatprep.subr.mxu0 0.0
    %239 = vmatpush1.msra.mxu0 %v107
    %240 = vmatprep.subr.mxu0 0.0
    %241 = vmatpush1.msra.mxu0 %v110
    %242 = vmatprep.subr.mxu0 0.0
    %243 = vmatpush1.msra.mxu0 %v113
    %244 = vmatprep.subr.mxu0 0.0
    %245 = vmatpush1.msra.mxu0 %v116
    %246 = vmatprep.subr.mxu0 0.0
    %247 = vmatpush1.msra.mxu0 %v119
    %248 = vmatprep.subr.mxu0 0.0
    %249 = vmatpush1.msra.mxu0 %v122
    %250 = vmatprep.subr.mxu0 0.0
    %251 = vmatpush1.msra.mxu0 %v125
    %252 = vmatprep.subr.mxu0 0.0
    %253 = vmatpush1.msra.mxu0 %v128
    %254 = vmatprep.subr.mxu0 0.0
    %255 = vmatpush1.msra.mxu0 %v131
    %256 = vmatprep.subr.mxu0 0.0
    %257 = vmatpush1.msra.mxu0 %v134
    %258 = vmatprep.subr.mxu0 0.0
    %259 = vmatpush1.msra.mxu0 %v137
    %260 = vmatprep.subr.mxu0 0.0
    %261 = vmatpush1.msra.mxu0 %v140
    %262 = vmatprep.subr.mxu0 0.0
    %263 = vmatpush1.msra.mxu0 %v143
    %264 = vmatprep.subr.mxu0 0.0
    %265 = vmatpush1.msra.mxu0 0.0
    %266 = vmatprep.subr.mxu0 0.0
    %267 = vmatpush1.msra.mxu0 0.0
    %268 = vmatprep.subr.mxu0 0.0
    %269 = vmatpush1.msra.mxu0 0.0
    %270 = vmatprep.subr.mxu0 0.0
    %271 = vmatpush1.msra.mxu0 0.0
    %272 = vmatprep.subr.mxu0 0.0
    %273 = vmatpush1.msra.mxu0 0.0
    %274 = vmatprep.subr.mxu0 0.0
    %275 = vmatpush1.msra.mxu0 0.0
    %276 = vmatprep.subr.mxu0 0.0
    %277 = vmatpush1.msra.mxu0 0.0
    %278 = vmatprep.subr.mxu0 0.0
    %279 = vmatpush1.msra.mxu0 0.0
    %280 = vmatprep.subr.mxu0 0.0
    %281 = vmatpush1.msra.mxu0 0.0
    %282 = vmatprep.subr.mxu0 0.0
    %283 = vmatpush1.msra.mxu0 0.0
    %284 = vmatprep.subr.mxu0 0.0
    %285 = vmatpush1.msra.mxu0 0.0
    %286 = vmatprep.subr.mxu0 0.0
    %287 = vmatpush1.msra.mxu0 0.0
    %288 = vmatprep.subr.mxu0 0.0
    %289 = vmatpush1.msra.mxu0 0.0
    %290 = vmatprep.subr.mxu0 0.0
    %291 = vmatpush1.msra.mxu0 0.0
    %292 = vmatprep.subr.mxu0 0.0
    %293 = vmatpush1.msra.mxu0 0.0
    %294 = vmatprep.subr.mxu0 0.0
    %295 = vmatpush1.msra.mxu0 0.0
    %296 = vmatprep.mubr.f32.mxu0 0.0
    %297 = vmatmul.mubr.f32.gmra.mrb[0].mxu0 %v95
    %v298 = vpop.f32.mrb[0].mxu0
    %v299 = vadd.f32 %v157, %v298
    %v300 = vpop.f32.mrb[0].mxu0
    %301 = vdwg.mxu0
    %v302 = vld [vmem:[#allocation9] sm:$0xff]
    %v303 = vld [vmem:[#allocation9 + $0x8] sm:$0xff]
    %v304 = vld [vmem:[#allocation9 + $0x10] sm:$0xff]
    %v305 = vld [vmem:[#allocation9 + $0x18] sm:$0xff]
    %v306 = vld [vmem:[#allocation9 + $0x20] sm:$0xff]
    %v307 = vld [vmem:[#allocation9 + $0x28] sm:$0xff]
    %v308 = vld [vmem:[#allocation9 + $0x30] sm:$0xff]
    %v309 = vld [vmem:[#allocation9 + $0x38] sm:$0xff]
    %v310 = vld [vmem:[#allocation9 + $0x40] sm:$0xff]
    %v311 = vld [vmem:[#allocation9 + $0x48] sm:$0xff]
    %v312 = vld [vmem:[#allocation9 + $0x50] sm:$0xff]
    %v313 = vld [vmem:[#allocation9 + $0x58] sm:$0xff]
    %v314 = vld [vmem:[#allocation9 + $0x60] sm:$0xff]
    %v315 = vld [vmem:[#allocation9 + $0x68] sm:$0xff]
    %v316 = vld [vmem:[#allocation9 + $0x70] sm:$0xff]
    %v317 = vld [vmem:[#allocation9 + $0x78] sm:$0xff]
    %v318 = vld [vmem:[#allocation9 + $0x80] sm:$0xff]
    %v319 = vld [vmem:[#allocation9 + $0x88] sm:$0xff]
    %v320 = vld [vmem:[#allocation9 + $0x90] sm:$0xff]
    %v321 = vld [vmem:[#allocation9 + $0x98] sm:$0xff]
    %v322 = vld [vmem:[#allocation9 + $0xa0] sm:$0xff]
    %v323 = vld [vmem:[#allocation9 + $0xa8] sm:$0xff]
    %v324 = vld [vmem:[#allocation9 + $0xb0] sm:$0xff]
    %v325 = vld [vmem:[#allocation9 + $0xb8] sm:$0xff]
    %v326 = vld [vmem:[#allocation9 + $0xc0] sm:$0xff]
    %v327 = vld [vmem:[#allocation9 + $0xc8] sm:$0xff]
    %v328 = vld [vmem:[#allocation9 + $0xd0] sm:$0xff]
    %v329 = vld [vmem:[#allocation9 + $0xd8] sm:$0xff]
    %v330 = vld [vmem:[#allocation9 + $0xe0] sm:$0xff]
    %v331 = vld [vmem:[#allocation9 + $0xe8] sm:$0xff]
    %v332 = vld [vmem:[#allocation9 + $0xf0] sm:$0xff]
    %v333 = vld [vmem:[#allocation9 + $0xf8] sm:$0xff]
    %334 = vmatprep.subr.mxu0 %v303
    %335 = vmatpush1.msra.mxu0 %v302
    %336 = vmatprep.subr.mxu0 %v305
    %337 = vmatpush1.msra.mxu0 %v304
    %338 = vmatprep.subr.mxu0 %v307
    %339 = vmatpush1.msra.mxu0 %v306
    %340 = vmatprep.subr.mxu0 %v309
    %341 = vmatpush1.msra.mxu0 %v308
    %342 = vmatprep.subr.mxu0 %v311
    %343 = vmatpush1.msra.mxu0 %v310
    %344 = vmatprep.subr.mxu0 %v313
    %345 = vmatpush1.msra.mxu0 %v312
    %346 = vmatprep.subr.mxu0 %v315
    %347 = vmatpush1.msra.mxu0 %v314
    %348 = vmatprep.subr.mxu0 %v317
    %349 = vmatpush1.msra.mxu0 %v316
    %350 = vmatprep.subr.mxu0 %v319
    %351 = vmatpush1.msra.mxu0 %v318
    %352 = vmatprep.subr.mxu0 %v321
    %353 = vmatpush1.msra.mxu0 %v320
    %354 = vmatprep.subr.mxu0 %v323
    %355 = vmatpush1.msra.mxu0 %v322
    %356 = vmatprep.subr.mxu0 %v325
    %357 = vmatpush1.msra.mxu0 %v324
    %358 = vmatprep.subr.mxu0 %v327
    %359 = vmatpush1.msra.mxu0 %v326
    %360 = vmatprep.subr.mxu0 %v329
    %361 = vmatpush1.msra.mxu0 %v328
    %362 = vmatprep.subr.mxu0 %v331
    %363 = vmatpush1.msra.mxu0 %v330
    %364 = vmatprep.subr.mxu0 %v333
    %365 = vmatpush1.msra.mxu0 %v332
    %366 = vmatprep.subr.mxu0 0.0
    %367 = vmatpush1.msra.mxu0 0.0
    %368 = vmatprep.subr.mxu0 0.0
    %369 = vmatpush1.msra.mxu0 0.0
    %370 = vmatprep.subr.mxu0 0.0
    %371 = vmatpush1.msra.mxu0 0.0
    %372 = vmatprep.subr.mxu0 0.0
    %373 = vmatpush1.msra.mxu0 0.0
    %374 = vmatprep.subr.mxu0 0.0
    %375 = vmatpush1.msra.mxu0 0.0
    %376 = vmatprep.subr.mxu0 0.0
    %377 = vmatpush1.msra.mxu0 0.0
    %378 = vmatprep.subr.mxu0 0.0
    %379 = vmatpush1.msra.mxu0 0.0
    %380 = vmatprep.subr.mxu0 0.0
    %381 = vmatpush1.msra.mxu0 0.0
    %382 = vmatprep.subr.mxu0 0.0
    %383 = vmatpush1.msra.mxu0 0.0
    %384 = vmatprep.subr.mxu0 0.0
    %385 = vmatpush1.msra.mxu0 0.0
    %386 = vmatprep.subr.mxu0 0.0
    %387 = vmatpush1.msra.mxu0 0.0
    %388 = vmatprep.subr.mxu0 0.0
    %389 = vmatpush1.msra.mxu0 0.0
    %390 = vmatprep.subr.mxu0 0.0
    %391 = vmatpush1.msra.mxu0 0.0
    %392 = vmatprep.subr.mxu0 0.0
    %393 = vmatpush1.msra.mxu0 0.0
    %394 = vmatprep.subr.mxu0 0.0
    %395 = vmatpush1.msra.mxu0 0.0
    %396 = vmatprep.subr.mxu0 0.0
    %397 = vmatpush1.msra.mxu0 0.0
    %398 = vmatprep.mubr.f32.mxu0 0.0
    %399 = vmatmul.mubr.f32.gmra.mrb[0].mxu0 %v94
    %v400 = vpop.f32.mrb[0].mxu0
    %v401 = vadd.f32 0.0, %v400
    %v402 = vpop.f32.mrb[0].mxu0
    %v403 = vadd.f32 0.0, %v402
    %404 = vdwg.mxu0
    %v405 = vadd.f32 %v228, %v401
    %v406 = vxor.u32 %v405, 2147483648
    %v407 = vmul.f32 %v406, 1.442695
    %v408 = vpow.pop %v407
    %v409 = vadd.f32 %v408, 1.0
    %v410 = vrcp.pop %v409
    %v411 = vmul.f32 1.0, %v410
    %v412 = vadd.f32 %v230, %v403
    %v413 = vxor.u32 %v412, 2147483648
    %v414 = vmul.f32 %v413, 1.442695
    %v415 = vpow.pop %v414
    %v416 = vadd.f32 %v415, 1.0
    %v417 = vrcp.pop %v416
    %v418 = vmul.f32 1.0, %v417
    %v419 = vmul.f32 %v411, %v94
    %v420 = vld [vmem:[#allocation11] sm:$0xff]
    %v421 = vld [vmem:[#allocation11 + $0x8] sm:$0xff]
    %v422 = vld [vmem:[#allocation11 + $0x10] sm:$0xff]
    %v423 = vld [vmem:[#allocation11 + $0x18] sm:$0xff]
    %v424 = vld [vmem:[#allocation11 + $0x20] sm:$0xff]
    %v425 = vld [vmem:[#allocation11 + $0x28] sm:$0xff]
    %v426 = vld [vmem:[#allocation11 + $0x30] sm:$0xff]
    %v427 = vld [vmem:[#allocation11 + $0x38] sm:$0xff]
    %v428 = vld [vmem:[#allocation11 + $0x40] sm:$0xff]
    %v429 = vld [vmem:[#allocation11 + $0x48] sm:$0xff]
    %v430 = vld [vmem:[#allocation11 + $0x50] sm:$0xff]
    %v431 = vld [vmem:[#allocation11 + $0x58] sm:$0xff]
    %v432 = vld [vmem:[#allocation11 + $0x60] sm:$0xff]
    %v433 = vld [vmem:[#allocation11 + $0x68] sm:$0xff]
    %v434 = vld [vmem:[#allocation11 + $0x70] sm:$0xff]
    %v435 = vld [vmem:[#allocation11 + $0x78] sm:$0xff]
    %436 = vmatprep.subr.mxu0 0.0
    %437 = vmatpush1.msra.mxu0 %v420
    %438 = vmatprep.subr.mxu0 0.0
    %439 = vmatpush1.msra.mxu0 %v421
    %440 = vmatprep.subr.mxu0 0.0
    %441 = vmatpush1.msra.mxu0 %v422
    %442 = vmatprep.subr.mxu0 0.0
    %443 = vmatpush1.msra.mxu0 %v423
    %444 = vmatprep.subr.mxu0 0.0
    %445 = vmatpush1.msra.mxu0 %v424
    %446 = vmatprep.subr.mxu0 0.0
    %447 = vmatpush1.msra.mxu0 %v425
    %448 = vmatprep.subr.mxu0 0.0
    %449 = vmatpush1.msra.mxu0 %v426
    %450 = vmatprep.subr.mxu0 0.0
    %451 = vmatpush1.msra.mxu0 %v427
    %452 = vmatprep.subr.mxu0 0.0
    %453 = vmatpush1.msra.mxu0 %v428
    %454 = vmatprep.subr.mxu0 0.0
    %455 = vmatpush1.msra.mxu0 %v429
    %456 = vmatprep.subr.mxu0 0.0
    %457 = vmatpush1.msra.mxu0 %v430
    %458 = vmatprep.subr.mxu0 0.0
    %459 = vmatpush1.msra.mxu0 %v431
    %460 = vmatprep.subr.mxu0 0.0
    %461 = vmatpush1.msra.mxu0 %v432
    %462 = vmatprep.subr.mxu0 0.0
    %463 = vmatpush1.msra.mxu0 %v433
    %464 = vmatprep.subr.mxu0 0.0
    %465 = vmatpush1.msra.mxu0 %v434
    %466 = vmatprep.subr.mxu0 0.0
    %467 = vmatpush1.msra.mxu0 %v435
    %468 = vmatprep.subr.mxu0 0.0
    %469 = vmatpush1.msra.mxu0 0.0
    %470 = vmatprep.subr.mxu0 0.0
    %471 = vmatpush1.msra.mxu0 0.0
    %472 = vmatprep.subr.mxu0 0.0
    %473 = vmatpush1.msra.mxu0 0.0
    %474 = vmatprep.subr.mxu0 0.0
    %475 = vmatpush1.msra.mxu0 0.0
    %476 = vmatprep.subr.mxu0 0.0
    %477 = vmatpush1.msra.mxu0 0.0
    %478 = vmatprep.subr.mxu0 0.0
    %479 = vmatpush1.msra.mxu0 0.0
    %480 = vmatprep.subr.mxu0 0.0
    %481 = vmatpush1.msra.mxu0 0.0
    %482 = vmatprep.subr.mxu0 0.0
    %483 = vmatpush1.msra.mxu0 0.0
    %484 = vmatprep.subr.mxu0 0.0
    %485 = vmatpush1.msra.mxu0 0.0
    %486 = vmatprep.subr.mxu0 0.0
    %487 = vmatpush1.msra.mxu0 0.0
    %488 = vmatprep.subr.mxu0 0.0
    %489 = vmatpush1.msra.mxu0 0.0
    %490 = vmatprep.subr.mxu0 0.0
    %491 = vmatpush1.msra.mxu0 0.0
    %492 = vmatprep.subr.mxu0 0.0
    %493 = vmatpush1.msra.mxu0 0.0
    %494 = vmatprep.subr.mxu0 0.0
    %495 = vmatpush1.msra.mxu0 0.0
    %496 = vmatprep.subr.mxu0 0.0
    %497 = vmatpush1.msra.mxu0 0.0
    %498 = vmatprep.subr.mxu0 0.0
    %499 = vmatpush1.msra.mxu0 0.0
    %500 = vmatprep.mubr.f32.mxu0 0.0
    %501 = vmatmul.mubr.f32.gmra.mrb[0].mxu0 %v419
    %v502 = vpop.f32.mrb[0].mxu0
    %v503 = vadd.f32 0.0, %v502
    %v504 = vpop.f32.mrb[0].mxu0
    %505 = vdwg.mxu0
    %v506 = vadd.f32 %v299, %v503
    %v507 = vtanh.pop %v506
    %v508 = vmul.f32 %v418, %v94
    %v509 = vsub.f32 1.0, %v418
    %v510 = vmul.f32 %v509, %v507
    %v511 = vadd.f32 %v508, %v510
    %512 = vst [vmem:[#allocation2] sm:$0xff] %v511
    %513 = vst [vmem:[#allocation12] sm:$0xff] %v511
    // Predicated region
    $region50: #{tpu_custom_call.1} parent=1 // pred_check
      _
    $region51: #{tpu_custom_call.1} parent=1 // pred_check_branch
      %515 = sbr.rel (0) target = $region53
    $region52: #{tpu_custom_call.1} parent=1 // pred_region
      %s517 = ssub.s32 128, 128
      %518 = vsyncadd [#allocation5], %s517
      %s520 = sshll.u32 [#allocation12], 4
      %s521 = int_to_ptr.vmem [resolvable:$true] %s520
      %523 = dma.vmem_to_hbm [thread:$0]  %s521, 128, %s6, [#allocation5]
    $region53: #{tpu_custom_call.1} parent=1 // pred_fallthru
      _
    // Predicated region
    $region54: #{tpu_custom_call.1} parent=1 // pred_check
      _
    $region55: #{tpu_custom_call.1} parent=1 // pred_check_branch
      %525 = sbr.rel (0) target = $region57
    $region56: #{tpu_custom_call.1} parent=1 // pred_region
      %526 = dma.done [#allocation5], 128
    $region57: #{tpu_custom_call.1} parent=1 // pred_fallthru
      _
    %527 = vsyncpa [#allocation4], 1
    %528 = vsyncpa [#allocation7], 1
    %529 = vsyncpa [#allocation10], 1
    %530 = vsyncpa [#allocation5], 1

// kernel: tpu_custom_call.1
$region0: #{tpu_custom_call.1}
  #allocation0 [shape = 'u32[]', space=smem, size = 0x4, offset = 0x4, fixed_abs, tag = 'smem constant byte address 0x4 - core index']
  #allocation1 [shape = 'u32[144,128]{1,0:T(1,128)}', space=vmem, size = 0x12000, scoped, tag = 'internal scratch']
  #allocation2 [shape = 'f32[8,128]{1,0:T(8,128)}', space=vmem, size = 0x1000, scoped, tag = 'scratch operand']
  %s0 = inlined_call_operand.hbm [shape: f32[1,8,128], index: 0, kind: input, shape index: {}]
  %s1 = inlined_call_operand.hbm [shape: f32[8,128], index: 1, kind: input, shape index: {}]
  %s2 = inlined_call_operand.hbm [shape: f32[128,384], index: 2, kind: input, shape index: {}]
  %s3 = inlined_call_operand.hbm [shape: f32[128,256], index: 3, kind: input, shape index: {}]
  %s4 = inlined_call_operand.hbm [shape: f32[128,128], index: 4, kind: input, shape index: {}]
  %s5 = inlined_call_operand.vmem [shape: f32[1,384], index: 5, kind: input, shape index: {}]
  %s6 = inlined_call_operand.hbm [shape: f32[1,8,128], index: 6, kind: output, shape index: {}]
  %s7 = sld [smem:[#allocation0]]
  $region58: #{tpu_custom_call.1} parent=0
    _
  %s9 = ssub.s32 1, %s7
  %s10 = scalar_select 0, %s9, %s7
  $region1: #{tpu_custom_call.1} parent=0
    #allocation3 [shape = 'u8[4096]{0}', space=vmem, size = 0x1000, scoped, tag = 'input window, operand 0, single buffered']
    #allocation4 [shape = 's32[1]{0}', space=sflag, size = 0x4, scoped, tag = 'scoped memory for tpu_custom_call.1']
    #allocation5 [shape = 's32[1]{0}', space=sflag, size = 0x4, scoped, tag = 'scoped memory for tpu_custom_call.1']
    #allocation6 [shape = 'u8[4096]{0}', space=vmem, size = 0x1000, scoped, tag = 'input window, operand 1, single buffered']
    #allocation7 [shape = 's32[1]{0}', space=sflag, size = 0x4, scoped, tag = 'scoped memory for tpu_custom_call.1']
    #allocation8 [shape = 'u8[196608]{0}', space=vmem, size = 0x30000, scoped, tag = 'input window, operand 2, single buffered']
    #allocation9 [shape = 'u8[131072]{0}', space=vmem, size = 0x20000, scoped, tag = 'input window, operand 3, single buffered']
    #allocation10 [shape = 's32[1]{0}', space=sflag, size = 0x4, scoped, tag = 'scoped memory for tpu_custom_call.1']
    #allocation11 [shape = 'u8[65536]{0}', space=vmem, size = 0x10000, scoped, tag = 'input window, operand 4, single buffered']
    #allocation12 [shape = 'u8[4096]{0}', space=vmem, size = 0x1000, scoped, tag = 'output window, operand 0, single buffered']
    %11 = vsyncpa [#allocation4], 0
    %12 = vsyncpa [#allocation7], 0
    %13 = vsyncpa [#allocation10], 0
    %14 = vsyncpa [#allocation5], 0
    // Predicated region
    $region2: #{tpu_custom_call.1} parent=1 // pred_check
      _
    $region3: #{tpu_custom_call.1} parent=1 // pred_check_branch
      %16 = sbr.rel (0) target = $region5
    $region4: #{tpu_custom_call.1} parent=1 // pred_region
      %s18 = ssub.s32 128, 128
      %19 = vsyncadd [#allocation4], %s18
      %s21 = sshll.u32 [#allocation3], 4
      %s22 = int_to_ptr.vmem [resolvable:$true] %s21
      %24 = dma.hbm_to_vmem [thread:$0]  %s0, 128, %s22, [#allocation4]
    $region5: #{tpu_custom_call.1} parent=1 // pred_fallthru
      _
    // Predicated region
    $region6: #{tpu_custom_call.1} parent=1 // pred_check
      _
    $region7: #{tpu_custom_call.1} parent=1 // pred_check_branch
      %26 = sbr.rel (0) target = $region9
    $region8: #{tpu_custom_call.1} parent=1 // pred_region
      %s28 = ssub.s32 128, 128
      %29 = vsyncadd [#allocation7], %s28
      %s31 = sshll.u32 [#allocation6], 4
      %s32 = int_to_ptr.vmem [resolvable:$true] %s31
      %34 = dma.hbm_to_vmem [thread:$0]  %s1, 128, %s32, [#allocation7]
    $region9: #{tpu_custom_call.1} parent=1 // pred_fallthru
      _
    // Predicated region
    $region10: #{tpu_custom_call.1} parent=1 // pred_check
      _
    $region11: #{tpu_custom_call.1} parent=1 // pred_check_branch
      %36 = sbr.rel (0) target = $region13
    $region12: #{tpu_custom_call.1} parent=1 // pred_region
      %s38 = ssub.s32 6144, 6144
      %39 = vsyncadd [#allocation7], %s38
      %s40 = sshll.u32 [#allocation8], 4
      %s41 = int_to_ptr.vmem [resolvable:$true] %s40
      %46 = dma.hbm_to_vmem [thread:$0]  %s2, 6144, %s41, [#allocation7], 384, 384, 24
    $region13: #{tpu_custom_call.1} parent=1 // pred_fallthru
      _
    // Predicated region
    $region14: #{tpu_custom_call.1} parent=1 // pred_check
      _
    $region15: #{tpu_custom_call.1} parent=1 // pred_check_branch
      %48 = sbr.rel (0) target = $region17
    $region16: #{tpu_custom_call.1} parent=1 // pred_region
      %s50 = ssub.s32 4096, 4096
      %51 = vsyncadd [#allocation10], %s50
      %s52 = sshll.u32 [#allocation9], 4
      %s53 = int_to_ptr.vmem [resolvable:$true] %s52
      %58 = dma.hbm_to_vmem [thread:$0]  %s3, 4096, %s53, [#allocation10], 256, 256, 16
    $region17: #{tpu_custom_call.1} parent=1 // pred_fallthru
      _
    // Predicated region
    $region18: #{tpu_custom_call.1} parent=1 // pred_check
      _
    $region19: #{tpu_custom_call.1} parent=1 // pred_check_branch
      %60 = sbr.rel (0) target = $region21
    $region20: #{tpu_custom_call.1} parent=1 // pred_region
      %s62 = ssub.s32 2048, 2048
      %63 = vsyncadd [#allocation10], %s62
      %s64 = sshll.u32 [#allocation11], 4
      %s65 = int_to_ptr.vmem [resolvable:$true] %s64
      %70 = dma.hbm_to_vmem [thread:$0]  %s4, 2048, %s65, [#allocation10], 128, 128, 8
    $region21: #{tpu_custom_call.1} parent=1 // pred_fallthru
      _
    // Predicated region
    $region22: #{tpu_custom_call.1} parent=1 // pred_check
      _
    $region23: #{tpu_custom_call.1} parent=1 // pred_check_branch
      %72 = sbr.rel (0) target = $region25
    $region24: #{tpu_custom_call.1} parent=1 // pred_region
      _
    $region25: #{tpu_custom_call.1} parent=1 // pred_fallthru
      _
    // Predicated region
    $region26: #{tpu_custom_call.1} parent=1 // pred_check
      _
    $region27: #{tpu_custom_call.1} parent=1 // pred_check_branch
      %74 = sbr.rel (0) target = $region29
    $region28: #{tpu_custom_call.1} parent=1 // pred_region
      %75 = dma.done [#allocation4], 128
    $region29: #{tpu_custom_call.1} parent=1 // pred_fallthru
      _
    // Predicated region
    $region30: #{tpu_custom_call.1} parent=1 // pred_check
      _
    $region31: #{tpu_custom_call.1} parent=1 // pred_check_branch
      %77 = sbr.rel (0) target = $region33
    $region32: #{tpu_custom_call.1} parent=1 // pred_region
      %78 = dma.done [#allocation7], 128
    $region33: #{tpu_custom_call.1} parent=1 // pred_fallthru
      _
    // Predicated region
    $region34: #{tpu_custom_call.1} parent=1 // pred_check
      _
    $region35: #{tpu_custom_call.1} parent=1 // pred_check_branch
      %80 = sbr.rel (0) target = $region37
    $region36: #{tpu_custom_call.1} parent=1 // pred_region
      %81 = dma.done [#allocation7], 6144
    $region37: #{tpu_custom_call.1} parent=1 // pred_fallthru
      _
    // Predicated region
    $region38: #{tpu_custom_call.1} parent=1 // pred_check
      _
    $region39: #{tpu_custom_call.1} parent=1 // pred_check_branch
      %83 = sbr.rel (0) target = $region41
    $region40: #{tpu_custom_call.1} parent=1 // pred_region
      %84 = dma.done [#allocation10], 4096
    $region41: #{tpu_custom_call.1} parent=1 // pred_fallthru
      _
    // Predicated region
    $region42: #{tpu_custom_call.1} parent=1 // pred_check
      _
    $region43: #{tpu_custom_call.1} parent=1 // pred_check_branch
      %86 = sbr.rel (0) target = $region45
    $region44: #{tpu_custom_call.1} parent=1 // pred_region
      %87 = dma.done [#allocation10], 2048
    $region45: #{tpu_custom_call.1} parent=1 // pred_fallthru
      _
    %p88 = scmp.eq.s32.totalorder 0, 0
    // Predicated region
    $region46: #{tpu_custom_call.1} parent=1 // pred_check
      %p89 = pneg %p88
    $region47: #{tpu_custom_call.1} parent=1 // pred_check_branch
      %91 = sbr.rel (%p89) target = $region49
    $region48: #{tpu_custom_call.1} parent=1 // pred_region
      %v92 = vld [vmem:[#allocation6] sm:$0xff]
      %93 = vst [vmem:[#allocation2] sm:$0xff] %v92
    $region49: #{tpu_custom_call.1} parent=1 // pred_fallthru
      _
    %v94 = vld [vmem:[#allocation2] sm:$0xff]
    %v95 = vld [vmem:[#allocation3] sm:$0xff]
    %v96 = vld [vmem:[#allocation8] sm:$0xff]
    %v97 = vld [vmem:[#allocation8 + $0x8] sm:$0xff]
    %v98 = vld [vmem:[#allocation8 + $0x10] sm:$0xff]
    %v99 = vld [vmem:[#allocation8 + $0x18] sm:$0xff]
    %v100 = vld [vmem:[#allocation8 + $0x20] sm:$0xff]
    %v101 = vld [vmem:[#allocation8 + $0x28] sm:$0xff]
    %v102 = vld [vmem:[#allocation8 + $0x30] sm:$0xff]
    %v103 = vld [vmem:[#allocation8 + $0x38] sm:$0xff]
    %v104 = vld [vmem:[#allocation8 + $0x40] sm:$0xff]
    %v105 = vld [vmem:[#allocation8 + $0x48] sm:$0xff]
    %v106 = vld [vmem:[#allocation8 + $0x50] sm:$0xff]
    %v107 = vld [vmem:[#allocation8 + $0x58] sm:$0xff]
    %v108 = vld [vmem:[#allocation8 + $0x60] sm:$0xff]
    %v109 = vld [vmem:[#allocation8 + $0x68] sm:$0xff]
    %v110 = vld [vmem:[#allocation8 + $0x70] sm:$0xff]
    %v111 = vld [vmem:[#allocation8 + $0x78] sm:$0xff]
    %v112 = vld [vmem:[#allocation8 + $0x80] sm:$0xff]
    %v113 = vld [vmem:[#allocation8 + $0x88] sm:$0xff]
    %v114 = vld [vmem:[#allocation8 + $0x90] sm:$0xff]
    %v115 = vld [vmem:[#allocation8 + $0x98] sm:$0xff]
    %v116 = vld [vmem:[#allocation8 + $0xa0] sm:$0xff]
    %v117 = vld [vmem:[#allocation8 + $0xa8] sm:$0xff]
    %v118 = vld [vmem:[#allocation8 + $0xb0] sm:$0xff]
    %v119 = vld [vmem:[#allocation8 + $0xb8] sm:$0xff]
    %v120 = vld [vmem:[#allocation8 + $0xc0] sm:$0xff]
    %v121 = vld [vmem:[#allocation8 + $0xc8] sm:$0xff]
    %v122 = vld [vmem:[#allocation8 + $0xd0] sm:$0xff]
    %v123 = vld [vmem:[#allocation8 + $0xd8] sm:$0xff]
    %v124 = vld [vmem:[#allocation8 + $0xe0] sm:$0xff]
    %v125 = vld [vmem:[#allocation8 + $0xe8] sm:$0xff]
    %v126 = vld [vmem:[#allocation8 + $0xf0] sm:$0xff]
    %v127 = vld [vmem:[#allocation8 + $0xf8] sm:$0xff]
    %v128 = vld [vmem:[#allocation8 + $0x100] sm:$0xff]
    %v129 = vld [vmem:[#allocation8 + $0x108] sm:$0xff]
    %v130 = vld [vmem:[#allocation8 + $0x110] sm:$0xff]
    %v131 = vld [vmem:[#allocation8 + $0x118] sm:$0xff]
    %v132 = vld [vmem:[#allocation8 + $0x120] sm:$0xff]
    %v133 = vld [vmem:[#allocation8 + $0x128] sm:$0xff]
    %v134 = vld [vmem:[#allocation8 + $0x130] sm:$0xff]
    %v135 = vld [vmem:[#allocation8 + $0x138] sm:$0xff]
    %v136 = vld [vmem:[#allocation8 + $0x140] sm:$0xff]
    %v137 = vld [vmem:[#allocation8 + $0x148] sm:$0xff]
    %v138 = vld [vmem:[#allocation8 + $0x150] sm:$0xff]
    %v139 = vld [vmem:[#allocation8 + $0x158] sm:$0xff]
    %v140 = vld [vmem:[#allocation8 + $0x160] sm:$0xff]
    %v141 = vld [vmem:[#allocation8 + $0x168] sm:$0xff]
    %v142 = vld [vmem:[#allocation8 + $0x170] sm:$0xff]
    %v143 = vld [vmem:[#allocation8 + $0x178] sm:$0xff]
    %v144 = vld [vmem:[%s5] sm:$0x7]
    %v146 = vlaneseq
    %v147 = vshrl.u32 %v146, 7
    %v148 = vsub.s32 0, %v147
    %v149 = vrot.slane %v144, %v148
    %v150 = vlaneseq
    %v151 = vshrl.u32 %v150, 7
    %v152 = vsub.s32 1, %v151
    %v153 = vrot.slane %v144, %v152
    %v154 = vlaneseq
    %v155 = vshrl.u32 %v154, 7
    %v156 = vsub.s32 2, %v155
    %v157 = vrot.slane %v144, %v156
    %161 = vmatprep.subr.mxu0 %v97
    %162 = vmatpush1.msra.mxu0 %v96
    %163 = vmatprep.subr.mxu0 %v100
    %164 = vmatpush1.msra.mxu0 %v99
    %165 = vmatprep.subr.mxu0 %v103
    %166 = vmatpush1.msra.mxu0 %v102
    %167 = vmatprep.subr.mxu0 %v106
    %168 = vmatpush1.msra.mxu0 %v105
    %169 = vmatprep.subr.mxu0 %v109
    %170 = vmatpush1.msra.mxu0 %v108
    %171 = vmatprep.subr.mxu0 %v112
    %172 = vmatpush1.msra.mxu0 %v111
    %173 = vmatprep.subr.mxu0 %v115
    %174 = vmatpush1.msra.mxu0 %v114
    %175 = vmatprep.subr.mxu0 %v118
    %176 = vmatpush1.msra.mxu0 %v117
    %177 = vmatprep.subr.mxu0 %v121
    %178 = vmatpush1.msra.mxu0 %v120
    %179 = vmatprep.subr.mxu0 %v124
    %180 = vmatpush1.msra.mxu0 %v123
    %181 = vmatprep.subr.mxu0 %v127
    %182 = vmatpush1.msra.mxu0 %v126
    %183 = vmatprep.subr.mxu0 %v130
    %184 = vmatpush1.msra.mxu0 %v129
    %185 = vmatprep.subr.mxu0 %v133
    %186 = vmatpush1.msra.mxu0 %v132
    %187 = vmatprep.subr.mxu0 %v136
    %188 = vmatpush1.msra.mxu0 %v135
    %189 = vmatprep.subr.mxu0 %v139
    %190 = vmatpush1.msra.mxu0 %v138
    %191 = vmatprep.subr.mxu0 %v142
    %192 = vmatpush1.msra.mxu0 %v141
    %193 = vmatprep.subr.mxu0 0.0
    %194 = vmatpush1.msra.mxu0 0.0
    %195 = vmatprep.subr.mxu0 0.0
    %196 = vmatpush1.msra.mxu0 0.0
    %197 = vmatprep.subr.mxu0 0.0
    %198 = vmatpush1.msra.mxu0 0.0
    %199 = vmatprep.subr.mxu0 0.0
    %200 = vmatpush1.msra.mxu0 0.0
    %201 = vmatprep.subr.mxu0 0.0
    %202 = vmatpush1.msra.mxu0 0.0
    %203 = vmatprep.subr.mxu0 0.0
    %204 = vmatpush1.msra.mxu0 0.0
    %205 = vmatprep.subr.mxu0 0.0
    %206 = vmatpush1.msra.mxu0 0.0
    %207 = vmatprep.subr.mxu0 0.0
    %208 = vmatpush1.msra.mxu0 0.0
    %209 = vmatprep.subr.mxu0 0.0
    %210 = vmatpush1.msra.mxu0 0.0
    %211 = vmatprep.subr.mxu0 0.0
    %212 = vmatpush1.msra.mxu0 0.0
    %213 = vmatprep.subr.mxu0 0.0
    %214 = vmatpush1.msra.mxu0 0.0
    %215 = vmatprep.subr.mxu0 0.0
    %216 = vmatpush1.msra.mxu0 0.0
    %217 = vmatprep.subr.mxu0 0.0
    %218 = vmatpush1.msra.mxu0 0.0
    %219 = vmatprep.subr.mxu0 0.0
    %220 = vmatpush1.msra.mxu0 0.0
    %221 = vmatprep.subr.mxu0 0.0
    %222 = vmatpush1.msra.mxu0 0.0
    %223 = vmatprep.subr.mxu0 0.0
    %224 = vmatpush1.msra.mxu0 0.0
    %225 = vmatprep.mubr.f32.mxu0 0.0
    %226 = vmatmul.mubr.f32.gmra.mrb[0].mxu0 %v95
    %v227 = vpop.f32.mrb[0].mxu0
    %v228 = vadd.f32 %v149, %v227
    %v229 = vpop.f32.mrb[0].mxu0
    %v230 = vadd.f32 %v153, %v229
    %231 = vdwg.mxu0
    %232 = vmatprep.subr.mxu0 0.0
    %233 = vmatpush1.msra.mxu0 %v98
    %234 = vmatprep.subr.mxu0 0.0
    %235 = vmatpush1.msra.mxu0 %v101
    %236 = vmatprep.subr.mxu0 0.0
    %237 = vmatpush1.msra.mxu0 %v104
    %238 = vmatprep.subr.mxu0 0.0
    %239 = vmatpush1.msra.mxu0 %v107
    %240 = vmatprep.subr.mxu0 0.0
    %241 = vmatpush1.msra.mxu0 %v110
    %242 = vmatprep.subr.mxu0 0.0
    %243 = vmatpush1.msra.mxu0 %v113
    %244 = vmatprep.subr.mxu0 0.0
    %245 = vmatpush1.msra.mxu0 %v116
    %246 = vmatprep.subr.mxu0 0.0
    %247 = vmatpush1.msra.mxu0 %v119
    %248 = vmatprep.subr.mxu0 0.0
    %249 = vmatpush1.msra.mxu0 %v122
    %250 = vmatprep.subr.mxu0 0.0
    %251 = vmatpush1.msra.mxu0 %v125
    %252 = vmatprep.subr.mxu0 0.0
    %253 = vmatpush1.msra.mxu0 %v128
    %254 = vmatprep.subr.mxu0 0.0
    %255 = vmatpush1.msra.mxu0 %v131
    %256 = vmatprep.subr.mxu0 0.0
    %257 = vmatpush1.msra.mxu0 %v134
    %258 = vmatprep.subr.mxu0 0.0
    %259 = vmatpush1.msra.mxu0 %v137
    %260 = vmatprep.subr.mxu0 0.0
    %261 = vmatpush1.msra.mxu0 %v140
    %262 = vmatprep.subr.mxu0 0.0
    %263 = vmatpush1.msra.mxu0 %v143
    %264 = vmatprep.subr.mxu0 0.0
    %265 = vmatpush1.msra.mxu0 0.0
    %266 = vmatprep.subr.mxu0 0.0
    %267 = vmatpush1.msra.mxu0 0.0
    %268 = vmatprep.subr.mxu0 0.0
    %269 = vmatpush1.msra.mxu0 0.0
    %270 = vmatprep.subr.mxu0 0.0
    %271 = vmatpush1.msra.mxu0 0.0
    %272 = vmatprep.subr.mxu0 0.0
    %273 = vmatpush1.msra.mxu0 0.0
    %274 = vmatprep.subr.mxu0 0.0
    %275 = vmatpush1.msra.mxu0 0.0
    %276 = vmatprep.subr.mxu0 0.0
    %277 = vmatpush1.msra.mxu0 0.0
    %278 = vmatprep.subr.mxu0 0.0
    %279 = vmatpush1.msra.mxu0 0.0
    %280 = vmatprep.subr.mxu0 0.0
    %281 = vmatpush1.msra.mxu0 0.0
    %282 = vmatprep.subr.mxu0 0.0
    %283 = vmatpush1.msra.mxu0 0.0
    %284 = vmatprep.subr.mxu0 0.0
    %285 = vmatpush1.msra.mxu0 0.0
    %286 = vmatprep.subr.mxu0 0.0
    %287 = vmatpush1.msra.mxu0 0.0
    %288 = vmatprep.subr.mxu0 0.0
    %289 = vmatpush1.msra.mxu0 0.0
    %290 = vmatprep.subr.mxu0 0.0
    %291 = vmatpush1.msra.mxu0 0.0
    %292 = vmatprep.subr.mxu0 0.0
    %293 = vmatpush1.msra.mxu0 0.0
    %294 = vmatprep.subr.mxu0 0.0
    %295 = vmatpush1.msra.mxu0 0.0
    %296 = vmatprep.mubr.f32.mxu0 0.0
    %297 = vmatmul.mubr.f32.gmra.mrb[0].mxu0 %v95
    %v298 = vpop.f32.mrb[0].mxu0
    %v299 = vadd.f32 %v157, %v298
    %v300 = vpop.f32.mrb[0].mxu0
    %301 = vdwg.mxu0
    %v302 = vld [vmem:[#allocation9] sm:$0xff]
    %v303 = vld [vmem:[#allocation9 + $0x8] sm:$0xff]
    %v304 = vld [vmem:[#allocation9 + $0x10] sm:$0xff]
    %v305 = vld [vmem:[#allocation9 + $0x18] sm:$0xff]
    %v306 = vld [vmem:[#allocation9 + $0x20] sm:$0xff]
    %v307 = vld [vmem:[#allocation9 + $0x28] sm:$0xff]
    %v308 = vld [vmem:[#allocation9 + $0x30] sm:$0xff]
    %v309 = vld [vmem:[#allocation9 + $0x38] sm:$0xff]
    %v310 = vld [vmem:[#allocation9 + $0x40] sm:$0xff]
    %v311 = vld [vmem:[#allocation9 + $0x48] sm:$0xff]
    %v312 = vld [vmem:[#allocation9 + $0x50] sm:$0xff]
    %v313 = vld [vmem:[#allocation9 + $0x58] sm:$0xff]
    %v314 = vld [vmem:[#allocation9 + $0x60] sm:$0xff]
    %v315 = vld [vmem:[#allocation9 + $0x68] sm:$0xff]
    %v316 = vld [vmem:[#allocation9 + $0x70] sm:$0xff]
    %v317 = vld [vmem:[#allocation9 + $0x78] sm:$0xff]
    %v318 = vld [vmem:[#allocation9 + $0x80] sm:$0xff]
    %v319 = vld [vmem:[#allocation9 + $0x88] sm:$0xff]
    %v320 = vld [vmem:[#allocation9 + $0x90] sm:$0xff]
    %v321 = vld [vmem:[#allocation9 + $0x98] sm:$0xff]
    %v322 = vld [vmem:[#allocation9 + $0xa0] sm:$0xff]
    %v323 = vld [vmem:[#allocation9 + $0xa8] sm:$0xff]
    %v324 = vld [vmem:[#allocation9 + $0xb0] sm:$0xff]
    %v325 = vld [vmem:[#allocation9 + $0xb8] sm:$0xff]
    %v326 = vld [vmem:[#allocation9 + $0xc0] sm:$0xff]
    %v327 = vld [vmem:[#allocation9 + $0xc8] sm:$0xff]
    %v328 = vld [vmem:[#allocation9 + $0xd0] sm:$0xff]
    %v329 = vld [vmem:[#allocation9 + $0xd8] sm:$0xff]
    %v330 = vld [vmem:[#allocation9 + $0xe0] sm:$0xff]
    %v331 = vld [vmem:[#allocation9 + $0xe8] sm:$0xff]
    %v332 = vld [vmem:[#allocation9 + $0xf0] sm:$0xff]
    %v333 = vld [vmem:[#allocation9 + $0xf8] sm:$0xff]
    %334 = vmatprep.subr.mxu0 %v303
    %335 = vmatpush1.msra.mxu0 %v302
    %336 = vmatprep.subr.mxu0 %v305
    %337 = vmatpush1.msra.mxu0 %v304
    %338 = vmatprep.subr.mxu0 %v307
    %339 = vmatpush1.msra.mxu0 %v306
    %340 = vmatprep.subr.mxu0 %v309
    %341 = vmatpush1.msra.mxu0 %v308
    %342 = vmatprep.subr.mxu0 %v311
    %343 = vmatpush1.msra.mxu0 %v310
    %344 = vmatprep.subr.mxu0 %v313
    %345 = vmatpush1.msra.mxu0 %v312
    %346 = vmatprep.subr.mxu0 %v315
    %347 = vmatpush1.msra.mxu0 %v314
    %348 = vmatprep.subr.mxu0 %v317
    %349 = vmatpush1.msra.mxu0 %v316
    %350 = vmatprep.subr.mxu0 %v319
    %351 = vmatpush1.msra.mxu0 %v318
    %352 = vmatprep.subr.mxu0 %v321
    %353 = vmatpush1.msra.mxu0 %v320
    %354 = vmatprep.subr.mxu0 %v323
    %355 = vmatpush1.msra.mxu0 %v322
    %356 = vmatprep.subr.mxu0 %v325
    %357 = vmatpush1.msra.mxu0 %v324
    %358 = vmatprep.subr.mxu0 %v327
    %359 = vmatpush1.msra.mxu0 %v326
    %360 = vmatprep.subr.mxu0 %v329
    %361 = vmatpush1.msra.mxu0 %v328
    %362 = vmatprep.subr.mxu0 %v331
    %363 = vmatpush1.msra.mxu0 %v330
    %364 = vmatprep.subr.mxu0 %v333
    %365 = vmatpush1.msra.mxu0 %v332
    %366 = vmatprep.subr.mxu0 0.0
    %367 = vmatpush1.msra.mxu0 0.0
    %368 = vmatprep.subr.mxu0 0.0
    %369 = vmatpush1.msra.mxu0 0.0
    %370 = vmatprep.subr.mxu0 0.0
    %371 = vmatpush1.msra.mxu0 0.0
    %372 = vmatprep.subr.mxu0 0.0
    %373 = vmatpush1.msra.mxu0 0.0
    %374 = vmatprep.subr.mxu0 0.0
    %375 = vmatpush1.msra.mxu0 0.0
    %376 = vmatprep.subr.mxu0 0.0
    %377 = vmatpush1.msra.mxu0 0.0
    %378 = vmatprep.subr.mxu0 0.0
    %379 = vmatpush1.msra.mxu0 0.0
    %380 = vmatprep.subr.mxu0 0.0
    %381 = vmatpush1.msra.mxu0 0.0
    %382 = vmatprep.subr.mxu0 0.0
    %383 = vmatpush1.msra.mxu0 0.0
    %384 = vmatprep.subr.mxu0 0.0
    %385 = vmatpush1.msra.mxu0 0.0
    %386 = vmatprep.subr.mxu0 0.0
    %387 = vmatpush1.msra.mxu0 0.0
    %388 = vmatprep.subr.mxu0 0.0
    %389 = vmatpush1.msra.mxu0 0.0
    %390 = vmatprep.subr.mxu0 0.0
    %391 = vmatpush1.msra.mxu0 0.0
    %392 = vmatprep.subr.mxu0 0.0
    %393 = vmatpush1.msra.mxu0 0.0
    %394 = vmatprep.subr.mxu0 0.0
    %395 = vmatpush1.msra.mxu0 0.0
    %396 = vmatprep.subr.mxu0 0.0
    %397 = vmatpush1.msra.mxu0 0.0
    %398 = vmatprep.mubr.f32.mxu0 0.0
    %399 = vmatmul.mubr.f32.gmra.mrb[0].mxu0 %v94
    %v400 = vpop.f32.mrb[0].mxu0
    %v401 = vadd.f32 0.0, %v400
    %v402 = vpop.f32.mrb[0].mxu0
    %v403 = vadd.f32 0.0, %v402
    %404 = vdwg.mxu0
    %v405 = vadd.f32 %v228, %v401
    %v406 = vxor.u32 %v405, 2147483648
    %v407 = vmul.f32 %v406, 1.442695
    %v408 = vpow.pop %v407
    %v409 = vadd.f32 %v408, 1.0
    %v410 = vrcp.pop %v409
    %v411 = vmul.f32 1.0, %v410
    %v412 = vadd.f32 %v230, %v403
    %v413 = vxor.u32 %v412, 2147483648
    %v414 = vmul.f32 %v413, 1.442695
    %v415 = vpow.pop %v414
    %v416 = vadd.f32 %v415, 1.0
    %v417 = vrcp.pop %v416
    %v418 = vmul.f32 1.0, %v417
    %v419 = vmul.f32 %v411, %v94
    %v420 = vld [vmem:[#allocation11] sm:$0xff]
    %v421 = vld [vmem:[#allocation11 + $0x8] sm:$0xff]
    %v422 = vld [vmem:[#allocation11 + $0x10] sm:$0xff]
    %v423 = vld [vmem:[#allocation11 + $0x18] sm:$0xff]
    %v424 = vld [vmem:[#allocation11 + $0x20] sm:$0xff]
    %v425 = vld [vmem:[#allocation11 + $0x28] sm:$0xff]
    %v426 = vld [vmem:[#allocation11 + $0x30] sm:$0xff]
    %v427 = vld [vmem:[#allocation11 + $0x38] sm:$0xff]
    %v428 = vld [vmem:[#allocation11 + $0x40] sm:$0xff]
    %v429 = vld [vmem:[#allocation11 + $0x48] sm:$0xff]
    %v430 = vld [vmem:[#allocation11 + $0x50] sm:$0xff]
    %v431 = vld [vmem:[#allocation11 + $0x58] sm:$0xff]
    %v432 = vld [vmem:[#allocation11 + $0x60] sm:$0xff]
    %v433 = vld [vmem:[#allocation11 + $0x68] sm:$0xff]
    %v434 = vld [vmem:[#allocation11 + $0x70] sm:$0xff]
    %v435 = vld [vmem:[#allocation11 + $0x78] sm:$0xff]
    %436 = vmatprep.subr.mxu0 0.0
    %437 = vmatpush1.msra.mxu0 %v420
    %438 = vmatprep.subr.mxu0 0.0
    %439 = vmatpush1.msra.mxu0 %v421
    %440 = vmatprep.subr.mxu0 0.0
    %441 = vmatpush1.msra.mxu0 %v422
    %442 = vmatprep.subr.mxu0 0.0
    %443 = vmatpush1.msra.mxu0 %v423
    %444 = vmatprep.subr.mxu0 0.0
    %445 = vmatpush1.msra.mxu0 %v424
    %446 = vmatprep.subr.mxu0 0.0
    %447 = vmatpush1.msra.mxu0 %v425
    %448 = vmatprep.subr.mxu0 0.0
    %449 = vmatpush1.msra.mxu0 %v426
    %450 = vmatprep.subr.mxu0 0.0
    %451 = vmatpush1.msra.mxu0 %v427
    %452 = vmatprep.subr.mxu0 0.0
    %453 = vmatpush1.msra.mxu0 %v428
    %454 = vmatprep.subr.mxu0 0.0
    %455 = vmatpush1.msra.mxu0 %v429
    %456 = vmatprep.subr.mxu0 0.0
    %457 = vmatpush1.msra.mxu0 %v430
    %458 = vmatprep.subr.mxu0 0.0
    %459 = vmatpush1.msra.mxu0 %v431
    %460 = vmatprep.subr.mxu0 0.0
    %461 = vmatpush1.msra.mxu0 %v432
    %462 = vmatprep.subr.mxu0 0.0
    %463 = vmatpush1.msra.mxu0 %v433
    %464 = vmatprep.subr.mxu0 0.0
    %465 = vmatpush1.msra.mxu0 %v434
    %466 = vmatprep.subr.mxu0 0.0
    %467 = vmatpush1.msra.mxu0 %v435
    %468 = vmatprep.subr.mxu0 0.0
    %469 = vmatpush1.msra.mxu0 0.0
    %470 = vmatprep.subr.mxu0 0.0
    %471 = vmatpush1.msra.mxu0 0.0
    %472 = vmatprep.subr.mxu0 0.0
    %473 = vmatpush1.msra.mxu0 0.0
    %474 = vmatprep.subr.mxu0 0.0
    %475 = vmatpush1.msra.mxu0 0.0
    %476 = vmatprep.subr.mxu0 0.0
    %477 = vmatpush1.msra.mxu0 0.0
    %478 = vmatprep.subr.mxu0 0.0
    %479 = vmatpush1.msra.mxu0 0.0
    %480 = vmatprep.subr.mxu0 0.0
    %481 = vmatpush1.msra.mxu0 0.0
    %482 = vmatprep.subr.mxu0 0.0
    %483 = vmatpush1.msra.mxu0 0.0
    %484 = vmatprep.subr.mxu0 0.0
    %485 = vmatpush1.msra.mxu0 0.0
    %486 = vmatprep.subr.mxu0 0.0
    %487 = vmatpush1.msra.mxu0 0.0
    %488 = vmatprep.subr.mxu0 0.0
    %489 = vmatpush1.msra.mxu0 0.0
    %490 = vmatprep.subr.mxu0 0.0
    %491 = vmatpush1.msra.mxu0 0.0
    %492 = vmatprep.subr.mxu0 0.0
    %493 = vmatpush1.msra.mxu0 0.0
    %494 = vmatprep.subr.mxu0 0.0
    %495 = vmatpush1.msra.mxu0 0.0
    %496 = vmatprep.subr.mxu0 0.0
    %497 = vmatpush1.msra.mxu0 0.0
    %498 = vmatprep.subr.mxu0 0.0
    %499 = vmatpush1.msra.mxu0 0.0
    %500 = vmatprep.mubr.f32.mxu0 0.0
    %501 = vmatmul.mubr.f32.gmra.mrb[0].mxu0 %v419
    %v502 = vpop.f32.mrb[0].mxu0
    %v503 = vadd.f32 0.0, %v502
    %v504 = vpop.f32.mrb[0].mxu0
    %505 = vdwg.mxu0
    %v506 = vadd.f32 %v299, %v503
    %v507 = vtanh.pop %v506
    %v508 = vmul.f32 %v418, %v94
    %v509 = vsub.f32 1.0, %v418
    %v510 = vmul.f32 %v509, %v507
    %v511 = vadd.f32 %v508, %v510
    %512 = vst [vmem:[#allocation2] sm:$0xff] %v511
    %513 = vst [vmem:[#allocation12] sm:$0xff] %v511
    // Predicated region
    $region50: #{tpu_custom_call.1} parent=1 // pred_check
      _
    $region51: #{tpu_custom_call.1} parent=1 // pred_check_branch
      %515 = sbr.rel (0) target = $region53
    $region52: #{tpu_custom_call.1} parent=1 // pred_region
      %s517 = ssub.s32 128, 128
      %518 = vsyncadd [#allocation5], %s517
      %s520 = sshll.u32 [#allocation12], 4
      %s521 = int_to_ptr.vmem [resolvable:$true] %s520
      %523 = dma.vmem_to_hbm [thread:$0]  %s521, 128, %s6, [#allocation5]
    $region53: #{tpu_custom_call.1} parent=1 // pred_fallthru
      _
    // Predicated region
    $region54: #{tpu_custom_call.1} parent=1 // pred_check
      _
    $region55: #{tpu_custom_call.1} parent=1 // pred_check_branch
      %525 = sbr.rel (0) target = $region57
    $region56: #{tpu_custom_call.1} parent=1 // pred_region
      %526 = dma.done [#allocation5], 128
    $region57: #{tpu_custom_call.1} parent=1 // pred_fallthru
      _
    %527 = vsyncpa [#allocation4], 1
    %528 = vsyncpa [#allocation7], 1
    %529 = vsyncpa [#allocation10], 1
    %530 = vsyncpa [#allocation5], 1

</llo_original>
